<compile_context>
chip_gen: v6e
topology: v6e:2x2x1
jax: 0.10.0
libtpu: 0.0.40
codegen_flags: <defaults>
</compile_context>

<pallas_src>
import functools
import math

import jax
import jax.numpy as jnp
from jax.experimental import pallas as pl
from jax.experimental.pallas import tpu as pltpu


def _mha_kernel(x_ref, wqkv_ref, bqkv_ref, wf_ref, bf_ref, gamma_ref, beta_ref,
                out_ref, attn_ref,
                q_scr, k_scr, v_scr, acc_scr,
                *, n_heads, d_head, bt, seq_len, ln_eps):
    d_model = n_heads * d_head
    rows = bt * seq_len
    h = pl.program_id(1)           # head index (inner, "arbitrary" axis)

    @pl.when(h == 0)
    def _project():
        # One wide fused QKV matmul over the whole (bt*L, D) row slab, using the
        # host-folded (doubled) weights, then scatter into head-major scratch.
        x2 = x_ref[...].reshape(rows, d_model)
        qkv = jnp.dot(x2, wqkv_ref[...],
                      preferred_element_type=jnp.float32) + bqkv_ref[...]
        for hh in range(n_heads):      # static slices -> one-time scratch scatter
            lo = hh * d_head
            q_scr[hh] = qkv[:, lo:lo + d_head].reshape(bt, seq_len, d_head)
            k_scr[hh] = qkv[:, d_model + lo:d_model + lo + d_head].reshape(
                bt, seq_len, d_head)
            v_scr[hh] = qkv[:, 2 * d_model + lo:2 * d_model + lo + d_head].reshape(
                bt, seq_len, d_head)
        # residual + fc bias seed the pre-LayerNorm accumulator
        acc_scr[...] = x2 + bf_ref[...]

    # ----- per-head attention, batched over the batch block -----
    q = q_scr[h]                      # (bt, L, dk)
    k = k_scr[h]
    v = v_scr[h]

    s = jnp.einsum('blk,btk->blt', q, k,
                   preferred_element_type=jnp.float32) * (1.0 / math.sqrt(d_head))
    s = s - jnp.max(s, axis=-1, keepdims=True)
    p = jnp.exp(s)
    # exact reciprocal keeps the softmax bit-faithful; approx=True (EUP) is an option
    p = p * pl.reciprocal(jnp.sum(p, axis=-1, keepdims=True), approx=False)
    attn_ref[0] = p                   # block (1, bt, L, L) at (h, b, 0, 0)

    o = jnp.einsum('blt,btv->blv', p, v,
                   preferred_element_type=jnp.float32)        # (bt, L, dk)
    # fc on concatenated heads == sum over heads of o_h @ Wf[h*dk:(h+1)*dk, :]
    acc_scr[...] += jnp.dot(o.reshape(rows, d_head), wf_ref[...],
                            preferred_element_type=jnp.float32)

    @pl.when(h == n_heads - 1)
    def _finalize():
        a = acc_scr[...]              # fc(o) + residual  (dropout = identity)
        mean = jnp.mean(a, axis=-1, keepdims=True)
        var = jnp.mean((a - mean) * (a - mean), axis=-1, keepdims=True)
        y = (a - mean) * jax.lax.rsqrt(var + ln_eps)
        y = y * gamma_ref[...] + beta_ref[...]
        out_ref[...] = y.reshape(bt, seq_len, d_model)


def mha_layer(x, params, *, n_heads, batch_block=None):
    """x: (B, L, D) float32.  Returns (out (B,L,D), attention (H,B,L,L))."""
    B, L, D = x.shape
    assert D % n_heads == 0
    d_head = D // n_heads

    hi = jax.lax.Precision.HIGHEST

    # Fold the doubled projection:  (x @ Wt + b) @ Wt + b == x @ (Wt@Wt) + (b@Wt + b)
    def fold(w, b):
        wt = w.T
        return jnp.dot(wt, wt, precision=hi), jnp.dot(b, wt, precision=hi) + b

    wq_e, bq_e = fold(params["wq"], params["bq"])
    wk_e, bk_e = fold(params["wk"], params["bk"])
    wv_e, bv_e = fold(params["wv"], params["bv"])
    w_qkv = jnp.concatenate([wq_e, wk_e, wv_e], axis=1)                # (D, 3D)
    b_qkv = jnp.concatenate([bq_e, bk_e, bv_e]).reshape(1, 3 * D)      # (1, 3D)
    wf_t = params["wf"].T                                              # (D, D) in (in,out)
    bf = params["bf"].reshape(1, D)
    gamma = params["ln_w"].reshape(1, D)
    beta = params["ln_b"].reshape(1, D)

    # Batch-block so each grid step presents ~256 rows to the MXU (capped by B).
    if batch_block is None:
        bt = max(1, min(B, 256 // max(L, 1)))
        while B % bt:
            bt -= 1
    else:
        bt = batch_block
        assert B % bt == 0
    nb = B // bt

    kernel = functools.partial(_mha_kernel, n_heads=n_heads, d_head=d_head,
                               bt=bt, seq_len=L, ln_eps=1e-5)

    out, attn = pl.pallas_call(
        kernel,
        out_shape=(
            jax.ShapeDtypeStruct((B, L, D), jnp.float32),
            jax.ShapeDtypeStruct((n_heads, B, L, L), jnp.float32),
        ),
        grid_spec=pltpu.PrefetchScalarGridSpec(
            num_scalar_prefetch=0,
            grid=(nb, n_heads),                     # (batch block, head)
            in_specs=[
                pl.BlockSpec((bt, L, D), lambda b, h: (b, 0, 0)),     # x
                pl.BlockSpec((D, 3 * D), lambda b, h: (0, 0)),        # fused folded W_qkv
                pl.BlockSpec((1, 3 * D), lambda b, h: (0, 0)),        # fused folded b_qkv
                pl.BlockSpec((d_head, D), lambda b, h: (h, 0)),       # fc rows for head h
                pl.BlockSpec((1, D), lambda b, h: (0, 0)),            # fc bias
                pl.BlockSpec((1, D), lambda b, h: (0, 0)),            # LN gamma
                pl.BlockSpec((1, D), lambda b, h: (0, 0)),            # LN beta
            ],
            out_specs=[
                pl.BlockSpec((bt, L, D), lambda b, h: (b, 0, 0)),     # out (written at last h)
                pl.BlockSpec((1, bt, L, L), lambda b, h: (h, b, 0, 0)),  # attention
            ],
            scratch_shapes=[
                pltpu.VMEM((n_heads, bt, L, d_head), jnp.float32),    # q (head-major)
                pltpu.VMEM((n_heads, bt, L, d_head), jnp.float32),    # k
                pltpu.VMEM((n_heads, bt, L, d_head), jnp.float32),    # v
                pltpu.VMEM((bt * L, D), jnp.float32),                 # fc/residual accumulator
            ]),
        compiler_params=pltpu.CompilerParams(
            dimension_semantics=("parallel", "arbitrary")),
    )(x, w_qkv, b_qkv, wf_t, bf, gamma, beta)
    return out, attn


def _reference(x, params, *, n_heads):
    """Pure-JAX reference mirroring the PyTorch forward (eval mode, sequential
    double projections, i.e. NOT folded)."""
    B, L, D = x.shape
    dk = D // n_heads

    def lin(a, w, b):  # PyTorch Linear: a @ W.T + b
        return a @ w.T + b

    q = lin(lin(x, params["wq"], params["bq"]), params["wq"], params["bq"])
    k = lin(lin(x, params["wk"], params["bk"]), params["wk"], params["bk"])
    v = lin(lin(x, params["wv"], params["bv"]), params["wv"], params["bv"])

    def split_heads(t):  # b l (h k) -> h b l k
        return jnp.transpose(t.reshape(B, L, n_heads, dk), (2, 0, 1, 3))

    qh, kh, vh = split_heads(q), split_heads(k), split_heads(v)
    attn = jnp.einsum("hblk,hbtk->hblt", qh, kh) / jnp.sqrt(jnp.float32(dk))
    attn = jax.nn.softmax(attn, axis=3)
    out = jnp.einsum("hblt,hbtv->hblv", attn, vh)
    out = jnp.transpose(out, (1, 2, 0, 3)).reshape(B, L, D)
    out = lin(out, params["wf"], params["bf"])
    out = out + x
    mean = jnp.mean(out, axis=-1, keepdims=True)
    var = jnp.mean((out - mean) ** 2, axis=-1, keepdims=True)
    out = (out - mean) / jnp.sqrt(var + 1e-5)
    out = out * params["ln_w"] + params["ln_b"]
    return out, attn


def init_params(key, d_model, n_heads):
    d_head = d_model / n_heads
    k = jax.random.split(key, 8)
    std_qkv = math.sqrt(2.0 / (d_model + d_head))
    std_fc = math.sqrt(2.0 / (d_model + d_model))     # xavier_normal_
    bias_bound = 1.0 / math.sqrt(d_model)             # PyTorch Linear default bias init
    u = lambda kk: jax.random.uniform(
        kk, (d_model,), jnp.float32, -bias_bound, bias_bound)
    return {
        "wq": std_qkv * jax.random.normal(k[0], (d_model, d_model), jnp.float32),
        "wk": std_qkv * jax.random.normal(k[1], (d_model, d_model), jnp.float32),
        "wv": std_qkv * jax.random.normal(k[2], (d_model, d_model), jnp.float32),
        "wf": std_fc * jax.random.normal(k[3], (d_model, d_model), jnp.float32),
        "bq": u(k[4]), "bk": u(k[5]), "bv": u(k[6]), "bf": u(k[7]),
        "ln_w": jnp.ones((d_model,), jnp.float32),
        "ln_b": jnp.zeros((d_model,), jnp.float32),
    }


if __name__ == "__main__":
    B, L, D, H = 2, 8, 32, 4
    key = jax.random.PRNGKey(0)
    kx, kp = jax.random.split(key)
    x = jax.random.normal(kx, (B, L, D), jnp.float32)
    params = init_params(kp, D, H)

    out, attn = mha_layer(x, params, n_heads=H)
    out = jax.block_until_ready(out)
    attn = jax.block_until_ready(attn)

    ref_out, ref_attn = _reference(x, params, n_heads=H)
    assert out.shape == (B, L, D) and attn.shape == (H, B, L, L)
    # The algebraic fold of the doubled projections (and per-head fc
    # accumulation) changes the floating-point evaluation order, so compare
    # with a modest tolerance; expected difference is ~1e-5.
    assert jnp.allclose(out, ref_out, atol=1e-3, rtol=1e-3), \
        f"out max err {float(jnp.max(jnp.abs(out - ref_out)))}"
    assert jnp.allclose(attn, ref_attn, atol=1e-3, rtol=1e-3), \
        f"attn max err {float(jnp.max(jnp.abs(attn - ref_attn)))}"

    print("KERNEL_OK")
</pallas_src>

<mosaic_0001>
module attributes {stable_mosaic.version = 11 : i64} {
  func.func @_mha_kernel(%arg0: i32, %arg1: i32, %arg2: memref<2x8x32xf32, #tpu.memory_space<vmem>>, %arg3: memref<32x96xf32, #tpu.memory_space<vmem>>, %arg4: memref<1x96xf32, #tpu.memory_space<vmem>>, %arg5: memref<8x32xf32, #tpu.memory_space<vmem>>, %arg6: memref<1x32xf32, #tpu.memory_space<vmem>>, %arg7: memref<1x32xf32, #tpu.memory_space<vmem>>, %arg8: memref<1x32xf32, #tpu.memory_space<vmem>>, %arg9: memref<2x8x32xf32, #tpu.memory_space<vmem>>, %arg10: memref<1x2x8x8xf32, #tpu.memory_space<vmem>>, %arg11: memref<4x2x8x8xf32, #tpu.memory_space<vmem>>, %arg12: memref<4x2x8x8xf32, #tpu.memory_space<vmem>>, %arg13: memref<4x2x8x8xf32, #tpu.memory_space<vmem>>, %arg14: memref<16x32xf32, #tpu.memory_space<vmem>>) attributes {dimension_semantics = [#tpu.dimension_semantics<parallel>, #tpu.dimension_semantics<arbitrary>], iteration_bounds = array<i64: 1, 4>, scalar_prefetch = 0 : i64, scratch_operands = 4 : i64, tpu.core_type = #tpu.core_type<tc>, window_params = [{transform_indices = @transform_0, window_bounds = array<i64: 2, 8, 32>}, {pipeline_mode = #tpu.pipeline_mode<synchronous>, transform_indices = @transform_1, window_bounds = array<i64: 32, 96>}, {pipeline_mode = #tpu.pipeline_mode<synchronous>, transform_indices = @transform_2, window_bounds = array<i64: 1, 96>}, {transform_indices = @transform_3, window_bounds = array<i64: 8, 32>}, {pipeline_mode = #tpu.pipeline_mode<synchronous>, transform_indices = @transform_4, window_bounds = array<i64: 1, 32>}, {pipeline_mode = #tpu.pipeline_mode<synchronous>, transform_indices = @transform_5, window_bounds = array<i64: 1, 32>}, {pipeline_mode = #tpu.pipeline_mode<synchronous>, transform_indices = @transform_6, window_bounds = array<i64: 1, 32>}, {transform_indices = @transform_7, window_bounds = array<i64: 2, 8, 32>}, {transform_indices = @transform_8, window_bounds = array<i64: 1, 2, 8, 8>}]} {
    %c0_i32 = arith.constant 0 : i32
    %0 = arith.cmpi eq, %arg1, %c0_i32 : i32
    %1 = arith.extui %0 : i1 to i32
    %c0_i32_0 = arith.constant 0 : i32
    %2 = arith.cmpi ne, %1, %c0_i32_0 : i32
    scf.if %2 {
      %c0_25 = arith.constant 0 : index
      %c0_26 = arith.constant 0 : index
      %c0_27 = arith.constant 0 : index
      %38 = vector.load %arg2[%c0_25, %c0_26, %c0_27] : memref<2x8x32xf32, #tpu.memory_space<vmem>>, vector<2x8x32xf32>
      %39 = vector.shape_cast %38 : vector<2x8x32xf32> to vector<16x32xf32>
      %c0_28 = arith.constant 0 : index
      %c0_29 = arith.constant 0 : index
      %40 = vector.load %arg3[%c0_28, %c0_29] : memref<32x96xf32, #tpu.memory_space<vmem>>, vector<32x96xf32>
      %cst_30 = arith.constant dense<0.000000e+00> : vector<16x96xf32>
      %41 = tpu.matmul %39, %40, %cst_30 {dimension_numbers = #tpu.dot_dimension_numbers<[1], [0], [0], [1], [0, 0, 1, 1], [], []>} : vector<16x32xf32>, vector<32x96xf32>, vector<16x96xf32> -> vector<16x96xf32>
      %c0_31 = arith.constant 0 : index
      %c0_32 = arith.constant 0 : index
      %42 = vector.load %arg4[%c0_31, %c0_32] : memref<1x96xf32, #tpu.memory_space<vmem>>, vector<1x96xf32>
      %43 = vector.broadcast %42 : vector<1x96xf32> to vector<16x96xf32>
      %44 = arith.addf %41, %43 : vector<16x96xf32>
      %45 = vector.extract_strided_slice %44 {offsets = [0, 0], sizes = [16, 8], strides = [1, 1]} : vector<16x96xf32> to vector<16x8xf32>
      %46 = vector.shape_cast %45 : vector<16x8xf32> to vector<2x8x8xf32>
      %c0_33 = arith.constant 0 : index
      %c0_34 = arith.constant 0 : index
      %c0_35 = arith.constant 0 : index
      %c0_36 = arith.constant 0 : index
      %47 = vector.load %arg11[%c0_33, %c0_34, %c0_35, %c0_36] : memref<4x2x8x8xf32, #tpu.memory_space<vmem>>, vector<1x2x8x8xf32>
      %48 = vector.shape_cast %47 : vector<1x2x8x8xf32> to vector<2x8x8xf32>
      %49 = vector.shape_cast %46 : vector<2x8x8xf32> to vector<1x2x8x8xf32>
      tpu.vector_store %arg11[%c0_33, %c0_34, %c0_35, %c0_36], %49 {strides = array<i32>} : memref<4x2x8x8xf32, #tpu.memory_space<vmem>>, vector<1x2x8x8xf32>,
      %50 = vector.extract_strided_slice %44 {offsets = [0, 32], sizes = [16, 8], strides = [1, 1]} : vector<16x96xf32> to vector<16x8xf32>
      %51 = vector.shape_cast %50 : vector<16x8xf32> to vector<2x8x8xf32>
      %c0_37 = arith.constant 0 : index
      %c0_38 = arith.constant 0 : index
      %c0_39 = arith.constant 0 : index
      %c0_40 = arith.constant 0 : index
      %52 = vector.load %arg12[%c0_37, %c0_38, %c0_39, %c0_40] : memref<4x2x8x8xf32, #tpu.memory_space<vmem>>, vector<1x2x8x8xf32>
      %53 = vector.shape_cast %52 : vector<1x2x8x8xf32> to vector<2x8x8xf32>
      %54 = vector.shape_cast %51 : vector<2x8x8xf32> to vector<1x2x8x8xf32>
      tpu.vector_store %arg12[%c0_37, %c0_38, %c0_39, %c0_40], %54 {strides = array<i32>} : memref<4x2x8x8xf32, #tpu.memory_space<vmem>>, vector<1x2x8x8xf32>,
      %55 = vector.extract_strided_slice %44 {offsets = [0, 64], sizes = [16, 8], strides = [1, 1]} : vector<16x96xf32> to vector<16x8xf32>
      %56 = vector.shape_cast %55 : vector<16x8xf32> to vector<2x8x8xf32>
      %c0_41 = arith.constant 0 : index
      %c0_42 = arith.constant 0 : index
      %c0_43 = arith.constant 0 : index
      %c0_44 = arith.constant 0 : index
      %57 = vector.load %arg13[%c0_41, %c0_42, %c0_43, %c0_44] : memref<4x2x8x8xf32, #tpu.memory_space<vmem>>, vector<1x2x8x8xf32>
      %58 = vector.shape_cast %57 : vector<1x2x8x8xf32> to vector<2x8x8xf32>
      %59 = vector.shape_cast %56 : vector<2x8x8xf32> to vector<1x2x8x8xf32>
      tpu.vector_store %arg13[%c0_41, %c0_42, %c0_43, %c0_44], %59 {strides = array<i32>} : memref<4x2x8x8xf32, #tpu.memory_space<vmem>>, vector<1x2x8x8xf32>,
      %60 = vector.extract_strided_slice %44 {offsets = [0, 8], sizes = [16, 8], strides = [1, 1]} : vector<16x96xf32> to vector<16x8xf32>
      %61 = vector.shape_cast %60 : vector<16x8xf32> to vector<2x8x8xf32>
      %c1 = arith.constant 1 : index
      %c0_45 = arith.constant 0 : index
      %c0_46 = arith.constant 0 : index
      %c0_47 = arith.constant 0 : index
      %62 = vector.load %arg11[%c1, %c0_45, %c0_46, %c0_47] : memref<4x2x8x8xf32, #tpu.memory_space<vmem>>, vector<1x2x8x8xf32>
      %63 = vector.shape_cast %62 : vector<1x2x8x8xf32> to vector<2x8x8xf32>
      %64 = vector.shape_cast %61 : vector<2x8x8xf32> to vector<1x2x8x8xf32>
      tpu.vector_store %arg11[%c1, %c0_45, %c0_46, %c0_47], %64 {strides = array<i32>} : memref<4x2x8x8xf32, #tpu.memory_space<vmem>>, vector<1x2x8x8xf32>,
      %65 = vector.extract_strided_slice %44 {offsets = [0, 40], sizes = [16, 8], strides = [1, 1]} : vector<16x96xf32> to vector<16x8xf32>
      %66 = vector.shape_cast %65 : vector<16x8xf32> to vector<2x8x8xf32>
      %c1_48 = arith.constant 1 : index
      %c0_49 = arith.constant 0 : index
      %c0_50 = arith.constant 0 : index
      %c0_51 = arith.constant 0 : index
      %67 = vector.load %arg12[%c1_48, %c0_49, %c0_50, %c0_51] : memref<4x2x8x8xf32, #tpu.memory_space<vmem>>, vector<1x2x8x8xf32>
      %68 = vector.shape_cast %67 : vector<1x2x8x8xf32> to vector<2x8x8xf32>
      %69 = vector.shape_cast %66 : vector<2x8x8xf32> to vector<1x2x8x8xf32>
      tpu.vector_store %arg12[%c1_48, %c0_49, %c0_50, %c0_51], %69 {strides = array<i32>} : memref<4x2x8x8xf32, #tpu.memory_space<vmem>>, vector<1x2x8x8xf32>,
      %70 = vector.extract_strided_slice %44 {offsets = [0, 72], sizes = [16, 8], strides = [1, 1]} : vector<16x96xf32> to vector<16x8xf32>
      %71 = vector.shape_cast %70 : vector<16x8xf32> to vector<2x8x8xf32>
      %c1_52 = arith.constant 1 : index
      %c0_53 = arith.constant 0 : index
      %c0_54 = arith.constant 0 : index
      %c0_55 = arith.constant 0 : index
      %72 = vector.load %arg13[%c1_52, %c0_53, %c0_54, %c0_55] : memref<4x2x8x8xf32, #tpu.memory_space<vmem>>, vector<1x2x8x8xf32>
      %73 = vector.shape_cast %72 : vector<1x2x8x8xf32> to vector<2x8x8xf32>
      %74 = vector.shape_cast %71 : vector<2x8x8xf32> to vector<1x2x8x8xf32>
      tpu.vector_store %arg13[%c1_52, %c0_53, %c0_54, %c0_55], %74 {strides = array<i32>} : memref<4x2x8x8xf32, #tpu.memory_space<vmem>>, vector<1x2x8x8xf32>,
      %75 = vector.extract_strided_slice %44 {offsets = [0, 16], sizes = [16, 8], strides = [1, 1]} : vector<16x96xf32> to vector<16x8xf32>
      %76 = vector.shape_cast %75 : vector<16x8xf32> to vector<2x8x8xf32>
      %c2 = arith.constant 2 : index
      %c0_56 = arith.constant 0 : index
      %c0_57 = arith.constant 0 : index
      %c0_58 = arith.constant 0 : index
      %77 = vector.load %arg11[%c2, %c0_56, %c0_57, %c0_58] : memref<4x2x8x8xf32, #tpu.memory_space<vmem>>, vector<1x2x8x8xf32>
      %78 = vector.shape_cast %77 : vector<1x2x8x8xf32> to vector<2x8x8xf32>
      %79 = vector.shape_cast %76 : vector<2x8x8xf32> to vector<1x2x8x8xf32>
      tpu.vector_store %arg11[%c2, %c0_56, %c0_57, %c0_58], %79 {strides = array<i32>} : memref<4x2x8x8xf32, #tpu.memory_space<vmem>>, vector<1x2x8x8xf32>,
      %80 = vector.extract_strided_slice %44 {offsets = [0, 48], sizes = [16, 8], strides = [1, 1]} : vector<16x96xf32> to vector<16x8xf32>
      %81 = vector.shape_cast %80 : vector<16x8xf32> to vector<2x8x8xf32>
      %c2_59 = arith.constant 2 : index
      %c0_60 = arith.constant 0 : index
      %c0_61 = arith.constant 0 : index
      %c0_62 = arith.constant 0 : index
      %82 = vector.load %arg12[%c2_59, %c0_60, %c0_61, %c0_62] : memref<4x2x8x8xf32, #tpu.memory_space<vmem>>, vector<1x2x8x8xf32>
      %83 = vector.shape_cast %82 : vector<1x2x8x8xf32> to vector<2x8x8xf32>
      %84 = vector.shape_cast %81 : vector<2x8x8xf32> to vector<1x2x8x8xf32>
      tpu.vector_store %arg12[%c2_59, %c0_60, %c0_61, %c0_62], %84 {strides = array<i32>} : memref<4x2x8x8xf32, #tpu.memory_space<vmem>>, vector<1x2x8x8xf32>,
      %85 = vector.extract_strided_slice %44 {offsets = [0, 80], sizes = [16, 8], strides = [1, 1]} : vector<16x96xf32> to vector<16x8xf32>
      %86 = vector.shape_cast %85 : vector<16x8xf32> to vector<2x8x8xf32>
      %c2_63 = arith.constant 2 : index
      %c0_64 = arith.constant 0 : index
      %c0_65 = arith.constant 0 : index
      %c0_66 = arith.constant 0 : index
      %87 = vector.load %arg13[%c2_63, %c0_64, %c0_65, %c0_66] : memref<4x2x8x8xf32, #tpu.memory_space<vmem>>, vector<1x2x8x8xf32>
      %88 = vector.shape_cast %87 : vector<1x2x8x8xf32> to vector<2x8x8xf32>
      %89 = vector.shape_cast %86 : vector<2x8x8xf32> to vector<1x2x8x8xf32>
      tpu.vector_store %arg13[%c2_63, %c0_64, %c0_65, %c0_66], %89 {strides = array<i32>} : memref<4x2x8x8xf32, #tpu.memory_space<vmem>>, vector<1x2x8x8xf32>,
      %90 = vector.extract_strided_slice %44 {offsets = [0, 24], sizes = [16, 8], strides = [1, 1]} : vector<16x96xf32> to vector<16x8xf32>
      %91 = vector.shape_cast %90 : vector<16x8xf32> to vector<2x8x8xf32>
      %c3 = arith.constant 3 : index
      %c0_67 = arith.constant 0 : index
      %c0_68 = arith.constant 0 : index
      %c0_69 = arith.constant 0 : index
      %92 = vector.load %arg11[%c3, %c0_67, %c0_68, %c0_69] : memref<4x2x8x8xf32, #tpu.memory_space<vmem>>, vector<1x2x8x8xf32>
      %93 = vector.shape_cast %92 : vector<1x2x8x8xf32> to vector<2x8x8xf32>
      %94 = vector.shape_cast %91 : vector<2x8x8xf32> to vector<1x2x8x8xf32>
      tpu.vector_store %arg11[%c3, %c0_67, %c0_68, %c0_69], %94 {strides = array<i32>} : memref<4x2x8x8xf32, #tpu.memory_space<vmem>>, vector<1x2x8x8xf32>,
      %95 = vector.extract_strided_slice %44 {offsets = [0, 56], sizes = [16, 8], strides = [1, 1]} : vector<16x96xf32> to vector<16x8xf32>
      %96 = vector.shape_cast %95 : vector<16x8xf32> to vector<2x8x8xf32>
      %c3_70 = arith.constant 3 : index
      %c0_71 = arith.constant 0 : index
      %c0_72 = arith.constant 0 : index
      %c0_73 = arith.constant 0 : index
      %97 = vector.load %arg12[%c3_70, %c0_71, %c0_72, %c0_73] : memref<4x2x8x8xf32, #tpu.memory_space<vmem>>, vector<1x2x8x8xf32>
      %98 = vector.shape_cast %97 : vector<1x2x8x8xf32> to vector<2x8x8xf32>
      %99 = vector.shape_cast %96 : vector<2x8x8xf32> to vector<1x2x8x8xf32>
      tpu.vector_store %arg12[%c3_70, %c0_71, %c0_72, %c0_73], %99 {strides = array<i32>} : memref<4x2x8x8xf32, #tpu.memory_space<vmem>>, vector<1x2x8x8xf32>,
      %100 = vector.extract_strided_slice %44 {offsets = [0, 88], sizes = [16, 8], strides = [1, 1]} : vector<16x96xf32> to vector<16x8xf32>
      %101 = vector.shape_cast %100 : vector<16x8xf32> to vector<2x8x8xf32>
      %c3_74 = arith.constant 3 : index
      %c0_75 = arith.constant 0 : index
      %c0_76 = arith.constant 0 : index
      %c0_77 = arith.constant 0 : index
      %102 = vector.load %arg13[%c3_74, %c0_75, %c0_76, %c0_77] : memref<4x2x8x8xf32, #tpu.memory_space<vmem>>, vector<1x2x8x8xf32>
      %103 = vector.shape_cast %102 : vector<1x2x8x8xf32> to vector<2x8x8xf32>
      %104 = vector.shape_cast %101 : vector<2x8x8xf32> to vector<1x2x8x8xf32>
      tpu.vector_store %arg13[%c3_74, %c0_75, %c0_76, %c0_77], %104 {strides = array<i32>} : memref<4x2x8x8xf32, #tpu.memory_space<vmem>>, vector<1x2x8x8xf32>,
      %c0_78 = arith.constant 0 : index
      %c0_79 = arith.constant 0 : index
      %105 = vector.load %arg6[%c0_78, %c0_79] : memref<1x32xf32, #tpu.memory_space<vmem>>, vector<1x32xf32>
      %106 = vector.broadcast %105 : vector<1x32xf32> to vector<16x32xf32>
      %107 = arith.addf %39, %106 : vector<16x32xf32>
      %c0_80 = arith.constant 0 : index
      %c0_81 = arith.constant 0 : index
      %108 = vector.load %arg14[%c0_80, %c0_81] : memref<16x32xf32, #tpu.memory_space<vmem>>, vector<16x32xf32>
      tpu.vector_store %arg14[%c0_80, %c0_81], %107 {strides = array<i32>} : memref<16x32xf32, #tpu.memory_space<vmem>>, vector<16x32xf32>,
    } else {
    }
    %3 = arith.index_cast %arg1 : i32 to index
    %c0 = arith.constant 0 : index
    %c0_1 = arith.constant 0 : index
    %c0_2 = arith.constant 0 : index
    %4 = vector.load %arg11[%3, %c0, %c0_1, %c0_2] : memref<4x2x8x8xf32, #tpu.memory_space<vmem>>, vector<1x2x8x8xf32>
    %5 = vector.shape_cast %4 : vector<1x2x8x8xf32> to vector<2x8x8xf32>
    %6 = arith.index_cast %arg1 : i32 to index
    %c0_3 = arith.constant 0 : index
    %c0_4 = arith.constant 0 : index
    %c0_5 = arith.constant 0 : index
    %7 = vector.load %arg12[%6, %c0_3, %c0_4, %c0_5] : memref<4x2x8x8xf32, #tpu.memory_space<vmem>>, vector<1x2x8x8xf32>
    %8 = vector.shape_cast %7 : vector<1x2x8x8xf32> to vector<2x8x8xf32>
    %9 = arith.index_cast %arg1 : i32 to index
    %c0_6 = arith.constant 0 : index
    %c0_7 = arith.constant 0 : index
    %c0_8 = arith.constant 0 : index
    %10 = vector.load %arg13[%9, %c0_6, %c0_7, %c0_8] : memref<4x2x8x8xf32, #tpu.memory_space<vmem>>, vector<1x2x8x8xf32>
    %11 = vector.shape_cast %10 : vector<1x2x8x8xf32> to vector<2x8x8xf32>
    "tpu.trace_start"() <{level = 10 : i32, message = "blk,btk->blt"}> : () -> ()
    %cst = arith.constant dense<0.000000e+00> : vector<2x8x8xf32>
    %12 = tpu.matmul %5, %8, %cst {dimension_numbers = #tpu.dot_dimension_numbers<[2], [2], [1], [1], [0, 0, 0, 1, 1, 1], [0], [0]>} : vector<2x8x8xf32>, vector<2x8x8xf32>, vector<2x8x8xf32> -> vector<2x8x8xf32>
    "tpu.trace_stop"() : () -> ()
    %cst_9 = arith.constant 0.353553385 : f32
    %13 = vector.broadcast %cst_9 : f32 to vector<2x8x8xf32>
    %14 = arith.mulf %12, %13 : vector<2x8x8xf32>
    %cst_10 = arith.constant dense<0xFF800000> : vector<2x8xf32>
    %15 = vector.multi_reduction <maximumf>, %14, %cst_10 [2] : vector<2x8x8xf32> to vector<2x8xf32>
    %16 = vector.shape_cast %15 : vector<2x8xf32> to vector<2x8x1xf32>
    %17 = vector.broadcast %16 : vector<2x8x1xf32> to vector<2x8x8xf32>
    %18 = arith.subf %14, %17 : vector<2x8x8xf32>
    %19 = math.exp %18 : vector<2x8x8xf32>
    %cst_11 = arith.constant dense<0.000000e+00> : vector<2x8xf32>
    %20 = vector.multi_reduction <add>, %19, %cst_11 [2] : vector<2x8x8xf32> to vector<2x8xf32>
    %21 = vector.shape_cast %20 : vector<2x8xf32> to vector<2x8x1xf32>
    %22 = tpu.reciprocal %21 : vector<2x8x1xf32> -> vector<2x8x1xf32>
    %23 = vector.broadcast %22 : vector<2x8x1xf32> to vector<2x8x8xf32>
    %24 = arith.mulf %19, %23 : vector<2x8x8xf32>
    %c0_12 = arith.constant 0 : index
    %c0_13 = arith.constant 0 : index
    %c0_14 = arith.constant 0 : index
    %c0_15 = arith.constant 0 : index
    %25 = vector.load %arg10[%c0_12, %c0_13, %c0_14, %c0_15] : memref<1x2x8x8xf32, #tpu.memory_space<vmem>>, vector<1x2x8x8xf32>
    %26 = vector.shape_cast %25 : vector<1x2x8x8xf32> to vector<2x8x8xf32>
    %27 = vector.shape_cast %24 : vector<2x8x8xf32> to vector<1x2x8x8xf32>
    tpu.vector_store %arg10[%c0_12, %c0_13, %c0_14, %c0_15], %27 {strides = array<i32>} : memref<1x2x8x8xf32, #tpu.memory_space<vmem>>, vector<1x2x8x8xf32>,
    "tpu.trace_start"() <{level = 10 : i32, message = "blt,btv->blv"}> : () -> ()
    %cst_16 = arith.constant dense<0.000000e+00> : vector<2x8x8xf32>
    %28 = tpu.matmul %24, %11, %cst_16 {dimension_numbers = #tpu.dot_dimension_numbers<[2], [1], [1], [2], [0, 0, 0, 1, 1, 2], [0], [0]>} : vector<2x8x8xf32>, vector<2x8x8xf32>, vector<2x8x8xf32> -> vector<2x8x8xf32>
    "tpu.trace_stop"() : () -> ()
    %c0_17 = arith.constant 0 : index
    %c0_18 = arith.constant 0 : index
    %29 = vector.load %arg14[%c0_17, %c0_18] : memref<16x32xf32, #tpu.memory_space<vmem>>, vector<16x32xf32>
    %30 = vector.shape_cast %28 : vector<2x8x8xf32> to vector<16x8xf32>
    %c0_19 = arith.constant 0 : index
    %c0_20 = arith.constant 0 : index
    %31 = vector.load %arg5[%c0_19, %c0_20] : memref<8x32xf32, #tpu.memory_space<vmem>>, vector<8x32xf32>
    %cst_21 = arith.constant dense<0.000000e+00> : vector<16x32xf32>
    %32 = tpu.matmul %30, %31, %cst_21 {dimension_numbers = #tpu.dot_dimension_numbers<[1], [0], [0], [1], [0, 0, 1, 1], [], []>} : vector<16x8xf32>, vector<8x32xf32>, vector<16x32xf32> -> vector<16x32xf32>
    %33 = arith.addf %29, %32 : vector<16x32xf32>
    %c0_22 = arith.constant 0 : index
    %c0_23 = arith.constant 0 : index
    %34 = vector.load %arg14[%c0_22, %c0_23] : memref<16x32xf32, #tpu.memory_space<vmem>>, vector<16x32xf32>
    tpu.vector_store %arg14[%c0_22, %c0_23], %33 {strides = array<i32>} : memref<16x32xf32, #tpu.memory_space<vmem>>, vector<16x32xf32>,
    %c3_i32 = arith.constant 3 : i32
    %35 = arith.cmpi eq, %arg1, %c3_i32 : i32
    %36 = arith.extui %35 : i1 to i32
    %c0_i32_24 = arith.constant 0 : i32
    %37 = arith.cmpi ne, %36, %c0_i32_24 : i32
    scf.if %37 {
      %c0_25 = arith.constant 0 : index
      %c0_26 = arith.constant 0 : index
      %38 = vector.load %arg14[%c0_25, %c0_26] : memref<16x32xf32, #tpu.memory_space<vmem>>, vector<16x32xf32>
      %cst_27 = arith.constant dense<0.000000e+00> : vector<16xf32>
      %39 = vector.multi_reduction <add>, %38, %cst_27 [1] : vector<16x32xf32> to vector<16xf32>
      %40 = vector.shape_cast %39 : vector<16xf32> to vector<16x1xf32>
      %cst_28 = arith.constant 3.200000e+01 : f32
      %41 = vector.broadcast %cst_28 : f32 to vector<16x1xf32>
      %42 = arith.divf %40, %41 : vector<16x1xf32>
      %43 = vector.broadcast %42 : vector<16x1xf32> to vector<16x32xf32>
      %44 = arith.subf %38, %43 : vector<16x32xf32>
      %45 = vector.broadcast %42 : vector<16x1xf32> to vector<16x32xf32>
      %46 = arith.subf %38, %45 : vector<16x32xf32>
      %47 = arith.mulf %44, %46 : vector<16x32xf32>
      %cst_29 = arith.constant dense<0.000000e+00> : vector<16xf32>
      %48 = vector.multi_reduction <add>, %47, %cst_29 [1] : vector<16x32xf32> to vector<16xf32>
      %49 = vector.shape_cast %48 : vector<16xf32> to vector<16x1xf32>
      %cst_30 = arith.constant 3.200000e+01 : f32
      %50 = vector.broadcast %cst_30 : f32 to vector<16x1xf32>
      %51 = arith.divf %49, %50 : vector<16x1xf32>
      %52 = vector.broadcast %42 : vector<16x1xf32> to vector<16x32xf32>
      %53 = arith.subf %38, %52 : vector<16x32xf32>
      %cst_31 = arith.constant 9.99999974E-6 : f32
      %54 = vector.broadcast %cst_31 : f32 to vector<16x1xf32>
      %55 = arith.addf %51, %54 : vector<16x1xf32>
      %56 = math.rsqrt %55 : vector<16x1xf32>
      %57 = vector.broadcast %56 : vector<16x1xf32> to vector<16x32xf32>
      %58 = arith.mulf %53, %57 : vector<16x32xf32>
      %c0_32 = arith.constant 0 : index
      %c0_33 = arith.constant 0 : index
      %59 = vector.load %arg7[%c0_32, %c0_33] : memref<1x32xf32, #tpu.memory_space<vmem>>, vector<1x32xf32>
      %60 = vector.broadcast %59 : vector<1x32xf32> to vector<16x32xf32>
      %61 = arith.mulf %58, %60 : vector<16x32xf32>
      %c0_34 = arith.constant 0 : index
      %c0_35 = arith.constant 0 : index
      %62 = vector.load %arg8[%c0_34, %c0_35] : memref<1x32xf32, #tpu.memory_space<vmem>>, vector<1x32xf32>
      %63 = vector.broadcast %62 : vector<1x32xf32> to vector<16x32xf32>
      %64 = arith.addf %61, %63 : vector<16x32xf32>
      %65 = vector.shape_cast %64 : vector<16x32xf32> to vector<2x8x32xf32>
      %c0_36 = arith.constant 0 : index
      %c0_37 = arith.constant 0 : index
      %c0_38 = arith.constant 0 : index
      %66 = vector.load %arg9[%c0_36, %c0_37, %c0_38] : memref<2x8x32xf32, #tpu.memory_space<vmem>>, vector<2x8x32xf32>
      tpu.vector_store %arg9[%c0_36, %c0_37, %c0_38], %65 {strides = array<i32>} : memref<2x8x32xf32, #tpu.memory_space<vmem>>, vector<2x8x32xf32>,
    } else {
    }
    return
  }
  func.func @transform_0(%arg0: i32, %arg1: i32) -> (i32, i32, i32) {
    %c0_i32 = arith.constant 0 : i32
    %c0_i32_0 = arith.constant 0 : i32
    %c0_i32_1 = arith.constant 0 : i32
    return %arg0, %c0_i32, %c0_i32_0 : i32, i32, i32
  }
  func.func @transform_1(%arg0: i32, %arg1: i32) -> (i32, i32) {
    %c0_i32 = arith.constant 0 : i32
    %c0_i32_0 = arith.constant 0 : i32
    %c0_i32_1 = arith.constant 0 : i32
    return %c0_i32, %c0_i32_0 : i32, i32
  }
  func.func @transform_2(%arg0: i32, %arg1: i32) -> (i32, i32) {
    %c0_i32 = arith.constant 0 : i32
    %c0_i32_0 = arith.constant 0 : i32
    %c0_i32_1 = arith.constant 0 : i32
    return %c0_i32, %c0_i32_0 : i32, i32
  }
  func.func @transform_3(%arg0: i32, %arg1: i32) -> (i32, i32) {
    %c0_i32 = arith.constant 0 : i32
    %c0_i32_0 = arith.constant 0 : i32
    return %arg1, %c0_i32 : i32, i32
  }
  func.func @transform_4(%arg0: i32, %arg1: i32) -> (i32, i32) {
    %c0_i32 = arith.constant 0 : i32
    %c0_i32_0 = arith.constant 0 : i32
    %c0_i32_1 = arith.constant 0 : i32
    return %c0_i32, %c0_i32_0 : i32, i32
  }
  func.func @transform_5(%arg0: i32, %arg1: i32) -> (i32, i32) {
    %c0_i32 = arith.constant 0 : i32
    %c0_i32_0 = arith.constant 0 : i32
    %c0_i32_1 = arith.constant 0 : i32
    return %c0_i32, %c0_i32_0 : i32, i32
  }
  func.func @transform_6(%arg0: i32, %arg1: i32) -> (i32, i32) {
    %c0_i32 = arith.constant 0 : i32
    %c0_i32_0 = arith.constant 0 : i32
    %c0_i32_1 = arith.constant 0 : i32
    return %c0_i32, %c0_i32_0 : i32, i32
  }
  func.func @transform_7(%arg0: i32, %arg1: i32) -> (i32, i32, i32) {
    %c0_i32 = arith.constant 0 : i32
    %c0_i32_0 = arith.constant 0 : i32
    %c0_i32_1 = arith.constant 0 : i32
    return %arg0, %c0_i32, %c0_i32_0 : i32, i32, i32
  }
  func.func @transform_8(%arg0: i32, %arg1: i32) -> (i32, i32, i32, i32) {
    %c0_i32 = arith.constant 0 : i32
    %c0_i32_0 = arith.constant 0 : i32
    %c0_i32_1 = arith.constant 0 : i32
    return %arg1, %arg0, %c0_i32, %c0_i32_0 : i32, i32, i32, i32
  }
}

</mosaic_0001>

<llo_original>
// kernel: tpu_custom_call.1
$region0: #{tpu_custom_call.1}
  #allocation0 [shape = 'u32[]', space=smem, size = 0x4, offset = 0x4, fixed_abs, tag = 'smem constant byte address 0x4 - core index']
  #allocation1 [shape = 'u32[144,128]{1,0:T(1,128)}', space=vmem, size = 0x12000, scoped, tag = 'internal scratch']
  #allocation2 [shape = 'f32[4,2,8,8]{3,2,1,0:T(8,128)}', space=vmem, size = 0x8000, scoped, tag = 'scratch operand']
  #allocation3 [shape = 'f32[4,2,8,8]{3,2,1,0:T(8,128)}', space=vmem, size = 0x8000, scoped, tag = 'scratch operand']
  #allocation4 [shape = 'f32[4,2,8,8]{3,2,1,0:T(8,128)}', space=vmem, size = 0x8000, scoped, tag = 'scratch operand']
  #allocation5 [shape = 'f32[16,32]{1,0:T(8,128)}', space=vmem, size = 0x2000, scoped, tag = 'scratch operand']
  %s0 = inlined_call_operand.hbm [shape: f32[2,8,32], index: 0, kind: input, shape index: {}]
  %s1 = inlined_call_operand.hbm [shape: f32[32,96], index: 1, kind: input, shape index: {}]
  %s2 = inlined_call_operand.vmem [shape: f32[1,96], index: 2, kind: input, shape index: {}]
  %s3 = inlined_call_operand.hbm [shape: f32[32,32], index: 3, kind: input, shape index: {}]
  %s4 = inlined_call_operand.vmem [shape: f32[1,32], index: 4, kind: input, shape index: {}]
  %s5 = inlined_call_operand.vmem [shape: f32[1,32], index: 5, kind: input, shape index: {}]
  %s6 = inlined_call_operand.vmem [shape: f32[1,32], index: 6, kind: input, shape index: {}]
  %s7 = inlined_call_operand.hbm [shape: f32[2,8,32], index: 7, kind: output, shape index: {0}]
  %s8 = inlined_call_operand.hbm [shape: f32[4,2,8,8], index: 8, kind: output, shape index: {1}]
  %9 = xla_tuple %s7, %s8
  %s10 = sld [smem:[#allocation0]]
  $region89: #{tpu_custom_call.1} parent=0
    _
  %s12 = ssub.s32 1, %s10
  %s13 = scalar_select 0, %s12, %s10
  $region1: #{tpu_custom_call.1} parent=0
    #allocation6 [shape = 'u8[8192]{0}', space=vmem, size = 0x2000, scoped, tag = 'input window, operand 0, single buffered']
    #allocation7 [shape = 's32[2]{0}', space=sflag, size = 0x8, scoped, tag = 'scoped memory for tpu_custom_call.1']
    #allocation8 [shape = 's32[2]{0}', space=sflag, size = 0x8, scoped, tag = 'scoped memory for tpu_custom_call.1']
    #allocation9 [shape = 'u8[16384]{0}', space=vmem, size = 0x4000, scoped, tag = 'input window, operand 1, single buffered']
    #allocation10 [shape = 's32[1]{0}', space=sflag, size = 0x4, scoped, tag = 'scoped memory for tpu_custom_call.1']
    #allocation11 [shape = 'u8[8192]{0}', space=vmem, size = 0x2000, scoped, tag = 'input window, operand 3']
    #allocation12 [shape = 'u8[8192]{0}', space=vmem, size = 0x2000, scoped, tag = 'output window, operand 0, single buffered']
    #allocation13 [shape = 'u8[16384]{0}', space=vmem, size = 0x4000, scoped, tag = 'output window, operand 1']
    #allocation14 [shape = 's32[2]{0}', space=sflag, size = 0x8, scoped, tag = 'scoped memory for tpu_custom_call.1']
    %14 = vsyncpa [#allocation7], 0
    %15 = vsyncpa [#allocation10], 0
    %16 = vsyncpa [#allocation8], 0
    %17 = vsyncpa [#allocation14], 0
    %s18 = scalar_lea.sflag [#allocation14], 1
    %19 = vsyncpa %s18, 0
    loop: start=0, step=1, limit=6
    $region2: #{tpu_custom_call.1} parent=1 // loop_pre_header
      _
    $region3: #{tpu_custom_call.1} parent=1 // loop_header
      %s21 = sphi 0, %s25
      %p22 = scmp.ge.s32.totalorder %s21, 6
      %s28 = sphi 0, %s40
      %s29 = sphi 0, %s36
      %s30 = sphi 0, %s28
      %s31 = sphi 0, %s29
      %s32 = sphi 0, %s30
      %s33 = sphi 0, %s31
      %s43 = sphi 0, %s45
      %s46 = sphi 0, %s43
      %s47 = sphi 0, %s46
      %s63 = sphi 0, %s47
      %s67 = sphi 0, %s67
      %s69 = sphi 0, %s67
      %s70 = sphi 0, %s69
      %s84 = sphi 0, %s70
      %s88 = sphi 0, %s88
      %s90 = sphi 0, %s88
      %s91 = sphi 0, %s90
      %s105 = sphi 0, %s91
      %s111 = sphi 0, %s113
      %s114 = sphi 0, %s111
      %s115 = sphi 0, %s114
      %s131 = sphi 0, %s115
      %s135 = sphi 0, %s135
      %s137 = sphi 0, %s135
      %s138 = sphi 0, %s137
      %s152 = sphi 0, %s138
      %s156 = sphi 0, %s156
      %s158 = sphi 0, %s156
      %s159 = sphi 0, %s158
      %s173 = sphi 0, %s159
      %s177 = sphi 0, %s177
      %s179 = sphi 0, %s177
      %s180 = sphi 0, %s179
      %s194 = sphi 0, %s180
      %s200 = sphi 0, %s202
      %s203 = sphi 0, %s200
      %s204 = sphi 0, %s203
      %s220 = sphi 0, %s204
      %s228 = sphi 0, %s230
      %s231 = sphi 0, %s228
      %s232 = sphi 0, %s231
      %s248 = sphi 0, %s232
    $region4: #{tpu_custom_call.1} parent=1 // loop_header_branch
      %24 = sbr.rel (%p22) target = $region8
    $region5: #{tpu_custom_call.1} parent=1 // loop_body
      %s26 = ssub.s32 %s21, 1
      %s27 = ssub.s32 %s21, 2
      %s34 = sadd.s32 1, %s29
      %p35 = scmp.ge.s32.totalorder %s34, 4
      %s36 = scalar_select %p35, 0, %s34
      %s37 = sadd.s32 1, %s28
      %s38 = scalar_select %p35, %s37, %s28
      %p39 = scmp.ge.s32.totalorder %s38, 1
      %s40 = scalar_select %p39, 0, %s38
      %s41 = ssub.s32 %s28, %s40
      %p42 = scmp.eq.s32.totalorder %s41, 0
      %s44 = sadd.s32 %s43, 1
      %s45 = scalar_select %p42, %s43, %s44
      %p48 = pneg %p42
      %p49 = scmp.eq.s32.totalorder %s21, 3
      %p50 = por %p48, %p49
      %p51 = scmp.ne.s32.totalorder %s43, %s46
      %p52 = scmp.eq.s32.totalorder %s21, 0
      %p53 = por %p51, %p52
      %p54 = scmp.ne.s32.totalorder %s43, %s46
      %p55 = scmp.eq.s32.totalorder %s26, 3
      %p56 = por %p54, %p55
      %p57 = scmp.ne.s32.totalorder %s46, %s47
      %p58 = scmp.eq.s32.totalorder %s26, 0
      %p59 = por %p57, %p58
      %p60 = scmp.ne.s32.totalorder %s46, %s47
      %p61 = scmp.eq.s32.totalorder %s27, 3
      %p62 = por %p60, %p61
      %p64 = scmp.ne.s32.totalorder %s47, %s63
      %p65 = scmp.eq.s32.totalorder %s27, 0
      %p66 = por %p64, %p65
      %s68 = sadd.s32 %s67, 1
      %p71 = scmp.eq.s32.totalorder %s21, 3
      %p72 = scmp.ne.s32.totalorder %s67, %s69
      %p73 = scmp.eq.s32.totalorder %s21, 0
      %p74 = por %p72, %p73
      %p75 = scmp.ne.s32.totalorder %s67, %s69
      %p76 = scmp.eq.s32.totalorder %s26, 3
      %p77 = por %p75, %p76
      %p78 = scmp.ne.s32.totalorder %s69, %s70
      %p79 = scmp.eq.s32.totalorder %s26, 0
      %p80 = por %p78, %p79
      %p81 = scmp.ne.s32.totalorder %s69, %s70
      %p82 = scmp.eq.s32.totalorder %s27, 3
      %p83 = por %p81, %p82
      %p85 = scmp.ne.s32.totalorder %s70, %s84
      %p86 = scmp.eq.s32.totalorder %s27, 0
      %p87 = por %p85, %p86
      %s89 = sadd.s32 %s88, 1
      %p92 = scmp.eq.s32.totalorder %s21, 3
      %p93 = scmp.ne.s32.totalorder %s88, %s90
      %p94 = scmp.eq.s32.totalorder %s21, 0
      %p95 = por %p93, %p94
      %p96 = scmp.ne.s32.totalorder %s88, %s90
      %p97 = scmp.eq.s32.totalorder %s26, 3
      %p98 = por %p96, %p97
      %p99 = scmp.ne.s32.totalorder %s90, %s91
      %p100 = scmp.eq.s32.totalorder %s26, 0
      %p101 = por %p99, %p100
      %p102 = scmp.ne.s32.totalorder %s90, %s91
      %p103 = scmp.eq.s32.totalorder %s27, 3
      %p104 = por %p102, %p103
      %p106 = scmp.ne.s32.totalorder %s91, %s105
      %p107 = scmp.eq.s32.totalorder %s27, 0
      %p108 = por %p106, %p107
      %s109 = ssub.s32 %s29, %s36
      %p110 = scmp.eq.s32.totalorder %s109, 0
      %s112 = sadd.s32 %s111, 1
      %s113 = scalar_select %p110, %s111, %s112
      %p116 = pneg %p110
      %p117 = scmp.eq.s32.totalorder %s21, 3
      %p118 = por %p116, %p117
      %p119 = scmp.ne.s32.totalorder %s111, %s114
      %p120 = scmp.eq.s32.totalorder %s21, 0
      %p121 = por %p119, %p120
      %p122 = scmp.ne.s32.totalorder %s111, %s114
      %p123 = scmp.eq.s32.totalorder %s26, 3
      %p124 = por %p122, %p123
      %p125 = scmp.ne.s32.totalorder %s114, %s115
      %p126 = scmp.eq.s32.totalorder %s26, 0
      %p127 = por %p125, %p126
      %p128 = scmp.ne.s32.totalorder %s114, %s115
      %p129 = scmp.eq.s32.totalorder %s27, 3
      %p130 = por %p128, %p129
      %p132 = scmp.ne.s32.totalorder %s115, %s131
      %p133 = scmp.eq.s32.totalorder %s27, 0
      %p134 = por %p132, %p133
      %s136 = sadd.s32 %s135, 1
      %p139 = scmp.eq.s32.totalorder %s21, 3
      %p140 = scmp.ne.s32.totalorder %s135, %s137
      %p141 = scmp.eq.s32.totalorder %s21, 0
      %p142 = por %p140, %p141
      %p143 = scmp.ne.s32.totalorder %s135, %s137
      %p144 = scmp.eq.s32.totalorder %s26, 3
      %p145 = por %p143, %p144
      %p146 = scmp.ne.s32.totalorder %s137, %s138
      %p147 = scmp.eq.s32.totalorder %s26, 0
      %p148 = por %p146, %p147
      %p149 = scmp.ne.s32.totalorder %s137, %s138
      %p150 = scmp.eq.s32.totalorder %s27, 3
      %p151 = por %p149, %p150
      %p153 = scmp.ne.s32.totalorder %s138, %s152
      %p154 = scmp.eq.s32.totalorder %s27, 0
      %p155 = por %p153, %p154
      %s157 = sadd.s32 %s156, 1
      %p160 = scmp.eq.s32.totalorder %s21, 3
      %p161 = scmp.ne.s32.totalorder %s156, %s158
      %p162 = scmp.eq.s32.totalorder %s21, 0
      %p163 = por %p161, %p162
      %p164 = scmp.ne.s32.totalorder %s156, %s158
      %p165 = scmp.eq.s32.totalorder %s26, 3
      %p166 = por %p164, %p165
      %p167 = scmp.ne.s32.totalorder %s158, %s159
      %p168 = scmp.eq.s32.totalorder %s26, 0
      %p169 = por %p167, %p168
      %p170 = scmp.ne.s32.totalorder %s158, %s159
      %p171 = scmp.eq.s32.totalorder %s27, 3
      %p172 = por %p170, %p171
      %p174 = scmp.ne.s32.totalorder %s159, %s173
      %p175 = scmp.eq.s32.totalorder %s27, 0
      %p176 = por %p174, %p175
      %s178 = sadd.s32 %s177, 1
      %p181 = scmp.eq.s32.totalorder %s21, 3
      %p182 = scmp.ne.s32.totalorder %s177, %s179
      %p183 = scmp.eq.s32.totalorder %s21, 0
      %p184 = por %p182, %p183
      %p185 = scmp.ne.s32.totalorder %s177, %s179
      %p186 = scmp.eq.s32.totalorder %s26, 3
      %p187 = por %p185, %p186
      %p188 = scmp.ne.s32.totalorder %s179, %s180
      %p189 = scmp.eq.s32.totalorder %s26, 0
      %p190 = por %p188, %p189
      %p191 = scmp.ne.s32.totalorder %s179, %s180
      %p192 = scmp.eq.s32.totalorder %s27, 3
      %p193 = por %p191, %p192
      %p195 = scmp.ne.s32.totalorder %s180, %s194
      %p196 = scmp.eq.s32.totalorder %s27, 0
      %p197 = por %p195, %p196
      %s198 = ssub.s32 %s28, %s40
      %p199 = scmp.eq.s32.totalorder %s198, 0
      %s201 = sadd.s32 %s200, 1
      %s202 = scalar_select %p199, %s200, %s201
      %p205 = pneg %p199
      %p206 = scmp.eq.s32.totalorder %s21, 3
      %p207 = por %p205, %p206
      %p208 = scmp.ne.s32.totalorder %s200, %s203
      %p209 = scmp.eq.s32.totalorder %s21, 0
      %p210 = por %p208, %p209
      %p211 = scmp.ne.s32.totalorder %s200, %s203
      %p212 = scmp.eq.s32.totalorder %s26, 3
      %p213 = por %p211, %p212
      %p214 = scmp.ne.s32.totalorder %s203, %s204
      %p215 = scmp.eq.s32.totalorder %s26, 0
      %p216 = por %p214, %p215
      %p217 = scmp.ne.s32.totalorder %s203, %s204
      %p218 = scmp.eq.s32.totalorder %s27, 3
      %p219 = por %p217, %p218
      %p221 = scmp.ne.s32.totalorder %s204, %s220
      %p222 = scmp.eq.s32.totalorder %s27, 0
      %p223 = por %p221, %p222
      %s224 = ssub.s32 %s29, %s36
      %s225 = ssub.s32 %s28, %s40
      %s226 = sor.u32 %s224, %s225
      %p227 = scmp.eq.s32.totalorder %s226, 0
      %s229 = sadd.s32 %s228, 1
      %s230 = scalar_select %p227, %s228, %s229
      %p233 = pneg %p227
      %p234 = scmp.eq.s32.totalorder %s21, 3
      %p235 = por %p233, %p234
      %p236 = scmp.ne.s32.totalorder %s228, %s231
      %p237 = scmp.eq.s32.totalorder %s21, 0
      %p238 = por %p236, %p237
      %p239 = scmp.ne.s32.totalorder %s228, %s231
      %p240 = scmp.eq.s32.totalorder %s26, 3
      %p241 = por %p239, %p240
      %p242 = scmp.ne.s32.totalorder %s231, %s232
      %p243 = scmp.eq.s32.totalorder %s26, 0
      %p244 = por %p242, %p243
      %p245 = scmp.ne.s32.totalorder %s231, %s232
      %p246 = scmp.eq.s32.totalorder %s27, 3
      %p247 = por %p245, %p246
      %p249 = scmp.ne.s32.totalorder %s232, %s248
      %p250 = scmp.eq.s32.totalorder %s27, 0
      %p251 = por %p249, %p250
      %p252 = scmp.le.s32.totalorder 1, %s21
      %p253 = scmp.lt.s32.totalorder %s21, 5
      %p254 = pnand %p252, %p253
      %p255 = pneg %p254
      // Predicated region
      $region9: #{tpu_custom_call.1} parent=5 // pred_check
        _
      $region10: #{tpu_custom_call.1} parent=5 // pred_check_branch
        %257 = sbr.rel (%p254) target = $region12
      $region11: #{tpu_custom_call.1} parent=5 // pred_region
        %s258 = ssub.s32 %s21, 1
        // Predicated region
        $region13: #{tpu_custom_call.1} parent=11 // pred_check
          %p259 = pneg %p59
        $region14: #{tpu_custom_call.1} parent=11 // pred_check_branch
          %261 = sbr.rel (%p259) target = $region16
        $region15: #{tpu_custom_call.1} parent=11 // pred_region
          %s262 = smul.u32 2, %s30
          %s264 = ssub.s32 256, 256
          %265 = vsyncadd [#allocation7], %s264
          %s266 = smul.addr %s262, 128
          %s267 = scalar_lea.hbm %s0, %s266
          %s268 = sshll.u32 [#allocation6], 4
          %s269 = int_to_ptr.vmem [resolvable:$true] %s268
          %274 = dma.hbm_to_vmem [thread:$0]  %s267, 256, %s269, [#allocation7], 128, 128, 8
        $region16: #{tpu_custom_call.1} parent=11 // pred_fallthru
          _
        // Predicated region
        $region17: #{tpu_custom_call.1} parent=11 // pred_check
          %p275 = pneg %p80
        $region18: #{tpu_custom_call.1} parent=11 // pred_check_branch
          %277 = sbr.rel (%p275) target = $region20
        $region19: #{tpu_custom_call.1} parent=11 // pred_region
          %s279 = ssub.s32 512, 512
          %280 = vsyncadd [#allocation10], %s279
          %s281 = sshll.u32 [#allocation9], 4
          %s282 = int_to_ptr.vmem [resolvable:$true] %s281
          %287 = dma.hbm_to_vmem [thread:$0]  %s1, 512, %s282, [#allocation10], 128, 128, 8
        $region20: #{tpu_custom_call.1} parent=11 // pred_fallthru
          _
        // Predicated region
        $region21: #{tpu_custom_call.1} parent=11 // pred_check
          %p288 = pneg %p101
        $region22: #{tpu_custom_call.1} parent=11 // pred_check_branch
          %290 = sbr.rel (%p288) target = $region24
        $region23: #{tpu_custom_call.1} parent=11 // pred_region
          _
        $region24: #{tpu_custom_call.1} parent=11 // pred_fallthru
          _
        // Predicated region
        $region25: #{tpu_custom_call.1} parent=11 // pred_check
          %p291 = pneg %p148
        $region26: #{tpu_custom_call.1} parent=11 // pred_check_branch
          %293 = sbr.rel (%p291) target = $region28
        $region27: #{tpu_custom_call.1} parent=11 // pred_region
          _
        $region28: #{tpu_custom_call.1} parent=11 // pred_fallthru
          _
        // Predicated region
        $region29: #{tpu_custom_call.1} parent=11 // pred_check
          %p294 = pneg %p169
        $region30: #{tpu_custom_call.1} parent=11 // pred_check_branch
          %296 = sbr.rel (%p294) target = $region32
        $region31: #{tpu_custom_call.1} parent=11 // pred_region
          _
        $region32: #{tpu_custom_call.1} parent=11 // pred_fallthru
          _
        // Predicated region
        $region33: #{tpu_custom_call.1} parent=11 // pred_check
          %p297 = pneg %p190
        $region34: #{tpu_custom_call.1} parent=11 // pred_check_branch
          %299 = sbr.rel (%p297) target = $region36
        $region35: #{tpu_custom_call.1} parent=11 // pred_region
          _
        $region36: #{tpu_custom_call.1} parent=11 // pred_fallthru
          _
      $region12: #{tpu_custom_call.1} parent=5 // pred_fallthru
        _
      %p300 = scmp.lt.s32.totalorder %s21, 4
      // Predicated region
      $region37: #{tpu_custom_call.1} parent=5 // pred_check
        %p301 = pneg %p300
      $region38: #{tpu_custom_call.1} parent=5 // pred_check_branch
        %303 = sbr.rel (%p301) target = $region40
      $region39: #{tpu_custom_call.1} parent=5 // pred_region
        // Predicated region
        $region41: #{tpu_custom_call.1} parent=39 // pred_check
          %p304 = pneg %p121
        $region42: #{tpu_custom_call.1} parent=39 // pred_check_branch
          %306 = sbr.rel (%p304) target = $region44
        $region43: #{tpu_custom_call.1} parent=39 // pred_region
          %s307 = sand.u32 %s21, 1
          %s308 = scalar_lea.sflag [#allocation7], %s307
          %s309 = sand.u32 %s111, 1
          %s310 = smul.addr %s309, 8
          %s311 = scalar_lea.vmem [#allocation11], %s310
          %s313 = ssub.s32 128, 128
          %314 = vsyncadd %s308, %s313
          %s315 = smul.addr %s29, 128
          %s316 = scalar_lea.hbm %s3, %s315
          %s318 = sshll.u32 %s311, 4
          %s319 = int_to_ptr.vmem [resolvable:$true] %s318
          %321 = dma.hbm_to_vmem [thread:$0]  %s316, 128, %s319, %s308
        $region44: #{tpu_custom_call.1} parent=39 // pred_fallthru
          _
      $region40: #{tpu_custom_call.1} parent=5 // pred_fallthru
        _
      %p322 = scmp.le.s32.totalorder 1, %s21
      %p323 = scmp.lt.s32.totalorder %s21, 5
      %p324 = pnand %p322, %p323
      %p325 = pneg %p324
      // Predicated region
      $region45: #{tpu_custom_call.1} parent=5 // pred_check
        _
      $region46: #{tpu_custom_call.1} parent=5 // pred_check_branch
        %327 = sbr.rel (%p324) target = $region48
      $region47: #{tpu_custom_call.1} parent=5 // pred_region
        %s328 = ssub.s32 %s21, 1
        // Predicated region
        $region49: #{tpu_custom_call.1} parent=47 // pred_check
          %p329 = pneg %p59
        $region50: #{tpu_custom_call.1} parent=47 // pred_check_branch
          %331 = sbr.rel (%p329) target = $region52
        $region51: #{tpu_custom_call.1} parent=47 // pred_region
          %332 = dma.done [#allocation7], 256
        $region52: #{tpu_custom_call.1} parent=47 // pred_fallthru
          _
        // Predicated region
        $region53: #{tpu_custom_call.1} parent=47 // pred_check
          %p333 = pneg %p80
        $region54: #{tpu_custom_call.1} parent=47 // pred_check_branch
          %335 = sbr.rel (%p333) target = $region56
        $region55: #{tpu_custom_call.1} parent=47 // pred_region
          %336 = dma.done [#allocation10], 512
        $region56: #{tpu_custom_call.1} parent=47 // pred_fallthru
          _
        %s337 = sand.u32 %s26, 1
        %s338 = scalar_lea.sflag [#allocation7], %s337
        %s339 = sand.u32 %s114, 1
        %s340 = smul.addr %s339, 8
        %s341 = scalar_lea.vmem [#allocation11], %s340
        // Predicated region
        $region57: #{tpu_custom_call.1} parent=47 // pred_check
          %p342 = pneg %p127
        $region58: #{tpu_custom_call.1} parent=47 // pred_check_branch
          %344 = sbr.rel (%p342) target = $region60
        $region59: #{tpu_custom_call.1} parent=47 // pred_region
          %345 = dma.done %s338, 128
        $region60: #{tpu_custom_call.1} parent=47 // pred_fallthru
          _
        %p346 = pneg %p59
        %p347 = pneg %p56
        %p348 = pneg %p80
        %p349 = pneg %p77
        %p350 = pneg %p101
        %p351 = pneg %p98
        %s352 = sand.u32 %s26, 1
        %s353 = scalar_lea.sflag [#allocation7], %s352
        %s354 = sand.u32 %s114, 1
        %s355 = smul.addr %s354, 8
        %s356 = scalar_lea.vmem [#allocation11], %s355
        %p357 = pneg %p127
        %p358 = pneg %p124
        %p359 = pneg %p148
        %p360 = pneg %p145
        %p361 = pneg %p169
        %p362 = pneg %p166
        %p363 = pneg %p190
        %p364 = pneg %p187
        %p365 = pneg %p216
        %p366 = pneg %p213
        %p367 = pneg %p244
        %p368 = pneg %p241
        %s369 = sand.u32 %s231, 1
        %s370 = scalar_lea.sflag [#allocation14], %s369
        %s371 = sand.u32 %s231, 1
        %s372 = smul.addr %s371, 16
        %s373 = scalar_lea.vmem [#allocation13], %s372
        %s374 = smul.u32 2, %s30
        %s375 = smul.u32 2, %s30
        %s376 = smul.u32 2, %s30
        %p377 = scmp.eq.s32.totalorder %s31, 0
        // Predicated region
        $region61: #{tpu_custom_call.1} parent=47 // pred_check
          %p378 = pneg %p377
        $region62: #{tpu_custom_call.1} parent=47 // pred_check_branch
          %380 = sbr.rel (%p378) target = $region64
        $region63: #{tpu_custom_call.1} parent=47 // pred_region
          %v381 = vld [vmem:[#allocation6] sm:$0xff]
          %v382 = vld [vmem:[#allocation6 + $0x8] sm:$0xff]
          %v383 = vld [vmem:[#allocation9] sm:$0xff]
          %v384 = vld [vmem:[#allocation9 + $0x8] sm:$0xff]
          %v385 = vld [vmem:[#allocation9 + $0x10] sm:$0xff]
          %v386 = vld [vmem:[#allocation9 + $0x18] sm:$0xff]
          %v387 = vld [vmem:[%s2] sm:$0x1]
          %v389 = vlaneseq
          %v390 = vshrl.u32 %v389, 7
          %v391 = vsub.s32 0, %v390
          %v392 = vrot.slane %v387, %v391
          %vm394 = vcmask 261120
          %v396 = vsel %vm394, %v381, 0
          %v399 = vsel %vm394, %v382, 0
          %401 = vmatprep.subr.mxu0 0.0
          %402 = vmatpush1.msra.mxu0 0.0
          %403 = vmatprep.subr.mxu0 0.0
          %404 = vmatpush1.msra.mxu0 0.0
          %405 = vmatprep.subr.mxu0 0.0
          %406 = vmatpush1.msra.mxu0 0.0
          %407 = vmatprep.subr.mxu0 0.0
          %408 = vmatpush1.msra.mxu0 0.0
          %409 = vmatprep.subr.mxu0 0.0
          %410 = vmatpush1.msra.mxu0 0.0
          %411 = vmatprep.subr.mxu0 0.0
          %412 = vmatpush1.msra.mxu0 0.0
          %413 = vmatprep.subr.mxu0 0.0
          %414 = vmatpush1.msra.mxu0 0.0
          %415 = vmatprep.subr.mxu0 0.0
          %416 = vmatpush1.msra.mxu0 0.0
          %417 = vmatprep.subr.mxu0 0.0
          %418 = vmatpush1.msra.mxu0 0.0
          %419 = vmatprep.subr.mxu0 0.0
          %420 = vmatpush1.msra.mxu0 0.0
          %421 = vmatprep.subr.mxu0 0.0
          %422 = vmatpush1.msra.mxu0 0.0
          %423 = vmatprep.subr.mxu0 0.0
          %424 = vmatpush1.msra.mxu0 0.0
          %425 = vmatprep.subr.mxu0 0.0
          %426 = vmatpush1.msra.mxu0 %v386
          %427 = vmatprep.subr.mxu0 0.0
          %428 = vmatpush1.msra.mxu0 %v385
          %429 = vmatprep.subr.mxu0 0.0
          %430 = vmatpush1.msra.mxu0 %v384
          %431 = vmatprep.subr.mxu0 0.0
          %432 = vmatpush1.msra.mxu0 %v383
          %433 = vmatprep.subr.mxu0 0.0
          %434 = vmatpush2.msra.mxu0 0.0
          %435 = vmatprep.subr.mxu0 0.0
          %436 = vmatpush2.msra.mxu0 0.0
          %437 = vmatprep.subr.mxu0 0.0
          %438 = vmatpush2.msra.mxu0 0.0
          %439 = vmatprep.subr.mxu0 0.0
          %440 = vmatpush2.msra.mxu0 0.0
          %441 = vmatprep.subr.mxu0 0.0
          %442 = vmatpush2.msra.mxu0 0.0
          %443 = vmatprep.subr.mxu0 0.0
          %444 = vmatpush2.msra.mxu0 0.0
          %445 = vmatprep.subr.mxu0 0.0
          %446 = vmatpush2.msra.mxu0 0.0
          %447 = vmatprep.subr.mxu0 0.0
          %448 = vmatpush2.msra.mxu0 0.0
          %449 = vmatprep.subr.mxu0 0.0
          %450 = vmatpush2.msra.mxu0 0.0
          %451 = vmatprep.subr.mxu0 0.0
          %452 = vmatpush2.msra.mxu0 0.0
          %453 = vmatprep.subr.mxu0 0.0
          %454 = vmatpush2.msra.mxu0 0.0
          %455 = vmatprep.subr.mxu0 0.0
          %456 = vmatpush2.msra.mxu0 0.0
          %457 = vmatprep.subr.mxu0 0.0
          %458 = vmatpush2.msra.mxu0 0.0
          %459 = vmatprep.subr.mxu0 0.0
          %460 = vmatpush2.msra.mxu0 0.0
          %461 = vmatprep.subr.mxu0 0.0
          %462 = vmatpush2.msra.mxu0 0.0
          %463 = vmatprep.subr.mxu0 0.0
          %464 = vmatpush2.msra.mxu0 0.0
          %465 = vmatprep.mubr.f32.mxu0 0.0
          %466 = vmatmul.mubr.f32.gmra.mxu0 %v396
          %v467 = vpop.f32.mrf.mxu0
          %v468 = vadd.f32 %v392, %v467
          %v469 = vpop.f32.mrf.mxu0
          %470 = vmatprep.mubr.f32.mxu0 0.0
          %471 = vmatmul.mubr.f32.gmra.mxu0 %v399
          %v472 = vpop.f32.mrf.mxu0
          %v473 = vadd.f32 %v392, %v472
          %v474 = vpop.f32.mrf.mxu0
          %475 = vdwg.mxu0
          %vm476 = vcmask 64512
          %477 = vst.msk [vmem:[#allocation2] sm:$0xff] %vm476, %v468
          %478 = vst.msk [vmem:[#allocation2 + $0x8] sm:$0xff] %vm476, %v473
          %481 = vrot.lane.b32.xlu0 %v468, 96
          %v482 = vpop.permute.xlu0 %481
          %483 = vrot.lane.b32.xlu0 %v473, 96
          %v484 = vpop.permute.xlu0 %483
          %487 = vst.msk [vmem:[#allocation3] sm:$0xff] %vm476, %v482
          %488 = vst.msk [vmem:[#allocation3 + $0x8] sm:$0xff] %vm476, %v484
          %489 = vrot.lane.b32.xlu0 %v468, 64
          %v490 = vpop.permute.xlu0 %489
          %491 = vrot.lane.b32.xlu0 %v473, 64
          %v492 = vpop.permute.xlu0 %491
          %495 = vst.msk [vmem:[#allocation4] sm:$0xff] %vm476, %v490
          %496 = vst.msk [vmem:[#allocation4 + $0x8] sm:$0xff] %vm476, %v492
          %497 = vrot.lane.b32.xlu0 %v468, 120
          %v498 = vpop.permute.xlu0 %497
          %499 = vrot.lane.b32.xlu0 %v473, 120
          %v500 = vpop.permute.xlu0 %499
          %s503 = scalar_lea.vmem [#allocation2], 16
          %504 = vst.msk [vmem:[%s503] sm:$0xff] %vm476, %v498
          %505 = vst.msk [vmem:[%s503 + $0x8] sm:$0xff] %vm476, %v500
          %506 = vrot.lane.b32.xlu0 %v468, 88
          %v507 = vpop.permute.xlu0 %506
          %508 = vrot.lane.b32.xlu0 %v473, 88
          %v509 = vpop.permute.xlu0 %508
          %s512 = scalar_lea.vmem [#allocation3], 16
          %513 = vst.msk [vmem:[%s512] sm:$0xff] %vm476, %v507
          %514 = vst.msk [vmem:[%s512 + $0x8] sm:$0xff] %vm476, %v509
          %515 = vrot.lane.b32.xlu0 %v468, 56
          %v516 = vpop.permute.xlu0 %515
          %517 = vrot.lane.b32.xlu0 %v473, 56
          %v518 = vpop.permute.xlu0 %517
          %s521 = scalar_lea.vmem [#allocation4], 16
          %522 = vst.msk [vmem:[%s521] sm:$0xff] %vm476, %v516
          %523 = vst.msk [vmem:[%s521 + $0x8] sm:$0xff] %vm476, %v518
          %524 = vrot.lane.b32.xlu0 %v468, 112
          %v525 = vpop.permute.xlu0 %524
          %526 = vrot.lane.b32.xlu0 %v473, 112
          %v527 = vpop.permute.xlu0 %526
          %s530 = scalar_lea.vmem [#allocation2], 32
          %531 = vst.msk [vmem:[%s530] sm:$0xff] %vm476, %v525
          %532 = vst.msk [vmem:[%s530 + $0x8] sm:$0xff] %vm476, %v527
          %533 = vrot.lane.b32.xlu0 %v468, 80
          %v534 = vpop.permute.xlu0 %533
          %535 = vrot.lane.b32.xlu0 %v473, 80
          %v536 = vpop.permute.xlu0 %535
          %s539 = scalar_lea.vmem [#allocation3], 32
          %540 = vst.msk [vmem:[%s539] sm:$0xff] %vm476, %v534
          %541 = vst.msk [vmem:[%s539 + $0x8] sm:$0xff] %vm476, %v536
          %542 = vrot.lane.b32.xlu0 %v468, 48
          %v543 = vpop.permute.xlu0 %542
          %544 = vrot.lane.b32.xlu0 %v473, 48
          %v545 = vpop.permute.xlu0 %544
          %s548 = scalar_lea.vmem [#allocation4], 32
          %549 = vst.msk [vmem:[%s548] sm:$0xff] %vm476, %v543
          %550 = vst.msk [vmem:[%s548 + $0x8] sm:$0xff] %vm476, %v545
          %551 = vrot.lane.b32.xlu0 %v468, 104
          %v552 = vpop.permute.xlu0 %551
          %553 = vrot.lane.b32.xlu0 %v473, 104
          %v554 = vpop.permute.xlu0 %553
          %s557 = scalar_lea.vmem [#allocation2], 48
          %558 = vst.msk [vmem:[%s557] sm:$0xff] %vm476, %v552
          %559 = vst.msk [vmem:[%s557 + $0x8] sm:$0xff] %vm476, %v554
          %560 = vrot.lane.b32.xlu0 %v468, 72
          %v561 = vpop.permute.xlu0 %560
          %562 = vrot.lane.b32.xlu0 %v473, 72
          %v563 = vpop.permute.xlu0 %562
          %s566 = scalar_lea.vmem [#allocation3], 48
          %567 = vst.msk [vmem:[%s566] sm:$0xff] %vm476, %v561
          %568 = vst.msk [vmem:[%s566 + $0x8] sm:$0xff] %vm476, %v563
          %569 = vrot.lane.b32.xlu0 %v468, 40
          %v570 = vpop.permute.xlu0 %569
          %571 = vrot.lane.b32.xlu0 %v473, 40
          %v572 = vpop.permute.xlu0 %571
          %s575 = scalar_lea.vmem [#allocation4], 48
          %576 = vst.msk [vmem:[%s575] sm:$0xff] %vm476, %v570
          %577 = vst.msk [vmem:[%s575 + $0x8] sm:$0xff] %vm476, %v572
          %v578 = vld [vmem:[%s4] sm:$0x1]
          %v580 = vlaneseq
          %v581 = vshrl.u32 %v580, 7
          %v582 = vsub.s32 0, %v581
          %v583 = vrot.slane %v578, %v582
          %v585 = vadd.f32 %v381, %v583
          %v586 = vadd.f32 %v382, %v583
          %587 = vst.msk [vmem:[#allocation5] sm:$0xff] %vm394, %v585
          %588 = vst.msk [vmem:[#allocation5 + $0x8] sm:$0xff] %vm394, %v586
        $region64: #{tpu_custom_call.1} parent=47 // pred_fallthru
          _
        %s589 = smul.u32 %s31, 16
        %s590 = scalar_lea.vmem [#allocation2], %s589
        %v591 = vld [vmem:[%s590] sm:$0xff]
        %v592 = vld [vmem:[%s590 + $0x8] sm:$0xff]
        %s593 = scalar_lea.vmem [#allocation3], %s589
        %v594 = vld [vmem:[%s593] sm:$0xff]
        %v595 = vld [vmem:[%s593 + $0x8] sm:$0xff]
        %s596 = scalar_lea.vmem [#allocation4], %s589
        %v597 = vld [vmem:[%s596] sm:$0xff]
        %v598 = vld [vmem:[%s596 + $0x8] sm:$0xff]
        %vm599 = vcmask 64512
        %v601 = vsel %vm599, %v591, 0
        %v604 = vsel %vm599, %v594, 0
        %606 = vmatprep.subr.mxu0 0.0
        %607 = vmatpush1.xpose.msra.mxu0 0.0
        %608 = vmatprep.subr.mxu0 0.0
        %609 = vmatpush1.xpose.msra.mxu0 0.0
        %610 = vmatprep.subr.mxu0 0.0
        %611 = vmatpush1.xpose.msra.mxu0 0.0
        %612 = vmatprep.subr.mxu0 0.0
        %613 = vmatpush1.xpose.msra.mxu0 0.0
        %614 = vmatprep.subr.mxu0 0.0
        %615 = vmatpush1.xpose.msra.mxu0 0.0
        %616 = vmatprep.subr.mxu0 0.0
        %617 = vmatpush1.xpose.msra.mxu0 0.0
        %618 = vmatprep.subr.mxu0 0.0
        %619 = vmatpush1.xpose.msra.mxu0 0.0
        %620 = vmatprep.subr.mxu0 0.0
        %621 = vmatpush1.xpose.msra.mxu0 0.0
        %622 = vmatprep.subr.mxu0 0.0
        %623 = vmatpush1.xpose.msra.mxu0 0.0
        %624 = vmatprep.subr.mxu0 0.0
        %625 = vmatpush1.xpose.msra.mxu0 0.0
        %626 = vmatprep.subr.mxu0 0.0
        %627 = vmatpush1.xpose.msra.mxu0 0.0
        %628 = vmatprep.subr.mxu0 0.0
        %629 = vmatpush1.xpose.msra.mxu0 0.0
        %630 = vmatprep.subr.mxu0 0.0
        %631 = vmatpush1.xpose.msra.mxu0 0.0
        %632 = vmatprep.subr.mxu0 0.0
        %633 = vmatpush1.xpose.msra.mxu0 0.0
        %634 = vmatprep.subr.mxu0 0.0
        %635 = vmatpush1.xpose.msra.mxu0 0.0
        %636 = vmatprep.subr.mxu0 0.0
        %637 = vmatpush1.xpose.msra.mxu0 %v604
        %638 = vmatprep.subr.mxu0 0.0
        %639 = vmatpush2.xpose.msra.mxu0 0.0
        %640 = vmatprep.subr.mxu0 0.0
        %641 = vmatpush2.xpose.msra.mxu0 0.0
        %642 = vmatprep.subr.mxu0 0.0
        %643 = vmatpush2.xpose.msra.mxu0 0.0
        %644 = vmatprep.subr.mxu0 0.0
        %645 = vmatpush2.xpose.msra.mxu0 0.0
        %646 = vmatprep.subr.mxu0 0.0
        %647 = vmatpush2.xpose.msra.mxu0 0.0
        %648 = vmatprep.subr.mxu0 0.0
        %649 = vmatpush2.xpose.msra.mxu0 0.0
        %650 = vmatprep.subr.mxu0 0.0
        %651 = vmatpush2.xpose.msra.mxu0 0.0
        %652 = vmatprep.subr.mxu0 0.0
        %653 = vmatpush2.xpose.msra.mxu0 0.0
        %654 = vmatprep.subr.mxu0 0.0
        %655 = vmatpush2.xpose.msra.mxu0 0.0
        %656 = vmatprep.subr.mxu0 0.0
        %657 = vmatpush2.xpose.msra.mxu0 0.0
        %658 = vmatprep.subr.mxu0 0.0
        %659 = vmatpush2.xpose.msra.mxu0 0.0
        %660 = vmatprep.subr.mxu0 0.0
        %661 = vmatpush2.xpose.msra.mxu0 0.0
        %662 = vmatprep.subr.mxu0 0.0
        %663 = vmatpush2.xpose.msra.mxu0 0.0
        %664 = vmatprep.subr.mxu0 0.0
        %665 = vmatpush2.xpose.msra.mxu0 0.0
        %666 = vmatprep.subr.mxu0 0.0
        %667 = vmatpush2.xpose.msra.mxu0 0.0
        %668 = vmatprep.subr.mxu0 0.0
        %669 = vmatpush2.xpose.msra.mxu0 0.0
        %670 = vmatprep.mubr.f32.mxu0 0.0
        %671 = vmatmul.mubr.f32.gmra.mxu0 %v601
        %v672 = vpop.f32.mrf.mxu0
        %v673 = vadd.f32 0.0, %v672
        %v674 = vpop.f32.mrf.mxu0
        %675 = vdwg.mxu0
        %v677 = vsel %vm599, %v592, 0
        %v680 = vsel %vm599, %v595, 0
        %682 = vmatprep.subr.mxu0 0.0
        %683 = vmatpush1.xpose.msra.mxu0 0.0
        %684 = vmatprep.subr.mxu0 0.0
        %685 = vmatpush1.xpose.msra.mxu0 0.0
        %686 = vmatprep.subr.mxu0 0.0
        %687 = vmatpush1.xpose.msra.mxu0 0.0
        %688 = vmatprep.subr.mxu0 0.0
        %689 = vmatpush1.xpose.msra.mxu0 0.0
        %690 = vmatprep.subr.mxu0 0.0
        %691 = vmatpush1.xpose.msra.mxu0 0.0
        %692 = vmatprep.subr.mxu0 0.0
        %693 = vmatpush1.xpose.msra.mxu0 0.0
        %694 = vmatprep.subr.mxu0 0.0
        %695 = vmatpush1.xpose.msra.mxu0 0.0
        %696 = vmatprep.subr.mxu0 0.0
        %697 = vmatpush1.xpose.msra.mxu0 0.0
        %698 = vmatprep.subr.mxu0 0.0
        %699 = vmatpush1.xpose.msra.mxu0 0.0
        %700 = vmatprep.subr.mxu0 0.0
        %701 = vmatpush1.xpose.msra.mxu0 0.0
        %702 = vmatprep.subr.mxu0 0.0
        %703 = vmatpush1.xpose.msra.mxu0 0.0
        %704 = vmatprep.subr.mxu0 0.0
        %705 = vmatpush1.xpose.msra.mxu0 0.0
        %706 = vmatprep.subr.mxu0 0.0
        %707 = vmatpush1.xpose.msra.mxu0 0.0
        %708 = vmatprep.subr.mxu0 0.0
        %709 = vmatpush1.xpose.msra.mxu0 0.0
        %710 = vmatprep.subr.mxu0 0.0
        %711 = vmatpush1.xpose.msra.mxu0 0.0
        %712 = vmatprep.subr.mxu0 0.0
        %713 = vmatpush1.xpose.msra.mxu0 %v680
        %714 = vmatprep.subr.mxu0 0.0
        %715 = vmatpush2.xpose.msra.mxu0 0.0
        %716 = vmatprep.subr.mxu0 0.0
        %717 = vmatpush2.xpose.msra.mxu0 0.0
        %718 = vmatprep.subr.mxu0 0.0
        %719 = vmatpush2.xpose.msra.mxu0 0.0
        %720 = vmatprep.subr.mxu0 0.0
        %721 = vmatpush2.xpose.msra.mxu0 0.0
        %722 = vmatprep.subr.mxu0 0.0
        %723 = vmatpush2.xpose.msra.mxu0 0.0
        %724 = vmatprep.subr.mxu0 0.0
        %725 = vmatpush2.xpose.msra.mxu0 0.0
        %726 = vmatprep.subr.mxu0 0.0
        %727 = vmatpush2.xpose.msra.mxu0 0.0
        %728 = vmatprep.subr.mxu0 0.0
        %729 = vmatpush2.xpose.msra.mxu0 0.0
        %730 = vmatprep.subr.mxu0 0.0
        %731 = vmatpush2.xpose.msra.mxu0 0.0
        %732 = vmatprep.subr.mxu0 0.0
        %733 = vmatpush2.xpose.msra.mxu0 0.0
        %734 = vmatprep.subr.mxu0 0.0
        %735 = vmatpush2.xpose.msra.mxu0 0.0
        %736 = vmatprep.subr.mxu0 0.0
        %737 = vmatpush2.xpose.msra.mxu0 0.0
        %738 = vmatprep.subr.mxu0 0.0
        %739 = vmatpush2.xpose.msra.mxu0 0.0
        %740 = vmatprep.subr.mxu0 0.0
        %741 = vmatpush2.xpose.msra.mxu0 0.0
        %742 = vmatprep.subr.mxu0 0.0
        %743 = vmatpush2.xpose.msra.mxu0 0.0
        %744 = vmatprep.subr.mxu0 0.0
        %745 = vmatpush2.xpose.msra.mxu0 0.0
        %746 = vmatprep.mubr.f32.mxu0 0.0
        %747 = vmatmul.mubr.f32.gmra.mxu0 %v677
        %v748 = vpop.f32.mrf.mxu0
        %v749 = vadd.f32 0.0, %v748
        %v750 = vpop.f32.mrf.mxu0
        %751 = vdwg.mxu0
        %v752 = vmul.f32 %v673, 0.35355338
        %v753 = vmul.f32 %v749, 0.35355338
        %v754 = vsel %vm599, %v752, -inf
        %755 = vmax.xlane.f32.xlu0 %v754
        %v756 = vpop.xlane.xlu0 %755
        %v757 = vsel %vm599, %v753, -inf
        %758 = vmax.xlane.f32.xlu0 %v757
        %v759 = vpop.xlane.xlu0 %758
        %v760 = vsub.f32 %v752, %v756
        %v761 = vsub.f32 %v753, %v759
        %v762 = vmul.f32 %v760, 1.442695
        %v763 = vpow.pop %v762
        %v764 = vmul.f32 %v761, 1.442695
        %v765 = vpow.pop %v764
        %v766 = vsel %vm599, %v763, 0.0
        %767 = vadd.xlane.f32.xlu0 %v766
        %v768 = vpop.xlane.xlu0 %767
        %v769 = vsel %vm599, %v765, 0.0
        %770 = vadd.xlane.f32.xlu0 %v769
        %v771 = vpop.xlane.xlu0 %770
        %v772 = vrcp.pop %v768
        %v773 = vrcp.pop %v771
        %v774 = vmul.f32 %v763, %v772
        %v775 = vmul.f32 %v765, %v773
        %776 = vst.msk [vmem:[%s373] sm:$0xff] %vm599, %v774
        %777 = vst.msk [vmem:[%s373 + $0x8] sm:$0xff] %vm599, %v775
        %v779 = vsel %vm599, %v774, 0
        %781 = vmatprep.subr.mxu0 0.0
        %782 = vmatpush1.msra.mxu0 0.0
        %783 = vmatprep.subr.mxu0 0.0
        %784 = vmatpush1.msra.mxu0 0.0
        %785 = vmatprep.subr.mxu0 0.0
        %786 = vmatpush1.msra.mxu0 0.0
        %787 = vmatprep.subr.mxu0 0.0
        %788 = vmatpush1.msra.mxu0 0.0
        %789 = vmatprep.subr.mxu0 0.0
        %790 = vmatpush1.msra.mxu0 0.0
        %791 = vmatprep.subr.mxu0 0.0
        %792 = vmatpush1.msra.mxu0 0.0
        %793 = vmatprep.subr.mxu0 0.0
        %794 = vmatpush1.msra.mxu0 0.0
        %795 = vmatprep.subr.mxu0 0.0
        %796 = vmatpush1.msra.mxu0 0.0
        %797 = vmatprep.subr.mxu0 0.0
        %798 = vmatpush1.msra.mxu0 0.0
        %799 = vmatprep.subr.mxu0 0.0
        %800 = vmatpush1.msra.mxu0 0.0
        %801 = vmatprep.subr.mxu0 0.0
        %802 = vmatpush1.msra.mxu0 0.0
        %803 = vmatprep.subr.mxu0 0.0
        %804 = vmatpush1.msra.mxu0 0.0
        %805 = vmatprep.subr.mxu0 0.0
        %806 = vmatpush1.msra.mxu0 0.0
        %807 = vmatprep.subr.mxu0 0.0
        %808 = vmatpush1.msra.mxu0 0.0
        %809 = vmatprep.subr.mxu0 0.0
        %810 = vmatpush1.msra.mxu0 0.0
        %811 = vmatprep.subr.mxu0 0.0
        %812 = vmatpush1.msra.mxu0 %v597
        %813 = vmatprep.subr.mxu0 0.0
        %814 = vmatpush2.msra.mxu0 0.0
        %815 = vmatprep.subr.mxu0 0.0
        %816 = vmatpush2.msra.mxu0 0.0
        %817 = vmatprep.subr.mxu0 0.0
        %818 = vmatpush2.msra.mxu0 0.0
        %819 = vmatprep.subr.mxu0 0.0
        %820 = vmatpush2.msra.mxu0 0.0
        %821 = vmatprep.subr.mxu0 0.0
        %822 = vmatpush2.msra.mxu0 0.0
        %823 = vmatprep.subr.mxu0 0.0
        %824 = vmatpush2.msra.mxu0 0.0
        %825 = vmatprep.subr.mxu0 0.0
        %826 = vmatpush2.msra.mxu0 0.0
        %827 = vmatprep.subr.mxu0 0.0
        %828 = vmatpush2.msra.mxu0 0.0
        %829 = vmatprep.subr.mxu0 0.0
        %830 = vmatpush2.msra.mxu0 0.0
        %831 = vmatprep.subr.mxu0 0.0
        %832 = vmatpush2.msra.mxu0 0.0
        %833 = vmatprep.subr.mxu0 0.0
        %834 = vmatpush2.msra.mxu0 0.0
        %835 = vmatprep.subr.mxu0 0.0
        %836 = vmatpush2.msra.mxu0 0.0
        %837 = vmatprep.subr.mxu0 0.0
        %838 = vmatpush2.msra.mxu0 0.0
        %839 = vmatprep.subr.mxu0 0.0
        %840 = vmatpush2.msra.mxu0 0.0
        %841 = vmatprep.subr.mxu0 0.0
        %842 = vmatpush2.msra.mxu0 0.0
        %843 = vmatprep.subr.mxu0 0.0
        %844 = vmatpush2.msra.mxu0 0.0
        %845 = vmatprep.mubr.f32.mxu0 0.0
        %846 = vmatmul.mubr.f32.gmra.mxu0 %v779
        %v847 = vpop.f32.mrf.mxu0
        %v848 = vadd.f32 0.0, %v847
        %v849 = vpop.f32.mrf.mxu0
        %850 = vdwg.mxu0
        %v852 = vsel %vm599, %v775, 0
        %854 = vmatprep.subr.mxu0 0.0
        %855 = vmatpush1.msra.mxu0 0.0
        %856 = vmatprep.subr.mxu0 0.0
        %857 = vmatpush1.msra.mxu0 0.0
        %858 = vmatprep.subr.mxu0 0.0
        %859 = vmatpush1.msra.mxu0 0.0
        %860 = vmatprep.subr.mxu0 0.0
        %861 = vmatpush1.msra.mxu0 0.0
        %862 = vmatprep.subr.mxu0 0.0
        %863 = vmatpush1.msra.mxu0 0.0
        %864 = vmatprep.subr.mxu0 0.0
        %865 = vmatpush1.msra.mxu0 0.0
        %866 = vmatprep.subr.mxu0 0.0
        %867 = vmatpush1.msra.mxu0 0.0
        %868 = vmatprep.subr.mxu0 0.0
        %869 = vmatpush1.msra.mxu0 0.0
        %870 = vmatprep.subr.mxu0 0.0
        %871 = vmatpush1.msra.mxu0 0.0
        %872 = vmatprep.subr.mxu0 0.0
        %873 = vmatpush1.msra.mxu0 0.0
        %874 = vmatprep.subr.mxu0 0.0
        %875 = vmatpush1.msra.mxu0 0.0
        %876 = vmatprep.subr.mxu0 0.0
        %877 = vmatpush1.msra.mxu0 0.0
        %878 = vmatprep.subr.mxu0 0.0
        %879 = vmatpush1.msra.mxu0 0.0
        %880 = vmatprep.subr.mxu0 0.0
        %881 = vmatpush1.msra.mxu0 0.0
        %882 = vmatprep.subr.mxu0 0.0
        %883 = vmatpush1.msra.mxu0 0.0
        %884 = vmatprep.subr.mxu0 0.0
        %885 = vmatpush1.msra.mxu0 %v598
        %886 = vmatprep.subr.mxu0 0.0
        %887 = vmatpush2.msra.mxu0 0.0
        %888 = vmatprep.subr.mxu0 0.0
        %889 = vmatpush2.msra.mxu0 0.0
        %890 = vmatprep.subr.mxu0 0.0
        %891 = vmatpush2.msra.mxu0 0.0
        %892 = vmatprep.subr.mxu0 0.0
        %893 = vmatpush2.msra.mxu0 0.0
        %894 = vmatprep.subr.mxu0 0.0
        %895 = vmatpush2.msra.mxu0 0.0
        %896 = vmatprep.subr.mxu0 0.0
        %897 = vmatpush2.msra.mxu0 0.0
        %898 = vmatprep.subr.mxu0 0.0
        %899 = vmatpush2.msra.mxu0 0.0
        %900 = vmatprep.subr.mxu0 0.0
        %901 = vmatpush2.msra.mxu0 0.0
        %902 = vmatprep.subr.mxu0 0.0
        %903 = vmatpush2.msra.mxu0 0.0
        %904 = vmatprep.subr.mxu0 0.0
        %905 = vmatpush2.msra.mxu0 0.0
        %906 = vmatprep.subr.mxu0 0.0
        %907 = vmatpush2.msra.mxu0 0.0
        %908 = vmatprep.subr.mxu0 0.0
        %909 = vmatpush2.msra.mxu0 0.0
        %910 = vmatprep.subr.mxu0 0.0
        %911 = vmatpush2.msra.mxu0 0.0
        %912 = vmatprep.subr.mxu0 0.0
        %913 = vmatpush2.msra.mxu0 0.0
        %914 = vmatprep.subr.mxu0 0.0
        %915 = vmatpush2.msra.mxu0 0.0
        %916 = vmatprep.subr.mxu0 0.0
        %917 = vmatpush2.msra.mxu0 0.0
        %918 = vmatprep.mubr.f32.mxu0 0.0
        %919 = vmatmul.mubr.f32.gmra.mxu0 %v852
        %v920 = vpop.f32.mrf.mxu0
        %v921 = vadd.f32 0.0, %v920
        %v922 = vpop.f32.mrf.mxu0
        %923 = vdwg.mxu0
        %v924 = vld [vmem:[#allocation5] sm:$0xff]
        %v925 = vld [vmem:[#allocation5 + $0x8] sm:$0xff]
        %v926 = vld [vmem:[%s341] sm:$0xff]
        %v928 = vsel %vm599, %v848, 0
        %v931 = vsel %vm599, %v921, 0
        %933 = vmatprep.subr.mxu0 0.0
        %934 = vmatpush1.msra.mxu0 0.0
        %935 = vmatprep.subr.mxu0 0.0
        %936 = vmatpush1.msra.mxu0 0.0
        %937 = vmatprep.subr.mxu0 0.0
        %938 = vmatpush1.msra.mxu0 0.0
        %939 = vmatprep.subr.mxu0 0.0
        %940 = vmatpush1.msra.mxu0 0.0
        %941 = vmatprep.subr.mxu0 0.0
        %942 = vmatpush1.msra.mxu0 0.0
        %943 = vmatprep.subr.mxu0 0.0
        %944 = vmatpush1.msra.mxu0 0.0
        %945 = vmatprep.subr.mxu0 0.0
        %946 = vmatpush1.msra.mxu0 0.0
        %947 = vmatprep.subr.mxu0 0.0
        %948 = vmatpush1.msra.mxu0 0.0
        %949 = vmatprep.subr.mxu0 0.0
        %950 = vmatpush1.msra.mxu0 0.0
        %951 = vmatprep.subr.mxu0 0.0
        %952 = vmatpush1.msra.mxu0 0.0
        %953 = vmatprep.subr.mxu0 0.0
        %954 = vmatpush1.msra.mxu0 0.0
        %955 = vmatprep.subr.mxu0 0.0
        %956 = vmatpush1.msra.mxu0 0.0
        %957 = vmatprep.subr.mxu0 0.0
        %958 = vmatpush1.msra.mxu0 0.0
        %959 = vmatprep.subr.mxu0 0.0
        %960 = vmatpush1.msra.mxu0 0.0
        %961 = vmatprep.subr.mxu0 0.0
        %962 = vmatpush1.msra.mxu0 0.0
        %963 = vmatprep.subr.mxu0 0.0
        %964 = vmatpush1.msra.mxu0 %v926
        %965 = vmatprep.subr.mxu0 0.0
        %966 = vmatpush2.msra.mxu0 0.0
        %967 = vmatprep.subr.mxu0 0.0
        %968 = vmatpush2.msra.mxu0 0.0
        %969 = vmatprep.subr.mxu0 0.0
        %970 = vmatpush2.msra.mxu0 0.0
        %971 = vmatprep.subr.mxu0 0.0
        %972 = vmatpush2.msra.mxu0 0.0
        %973 = vmatprep.subr.mxu0 0.0
        %974 = vmatpush2.msra.mxu0 0.0
        %975 = vmatprep.subr.mxu0 0.0
        %976 = vmatpush2.msra.mxu0 0.0
        %977 = vmatprep.subr.mxu0 0.0
        %978 = vmatpush2.msra.mxu0 0.0
        %979 = vmatprep.subr.mxu0 0.0
        %980 = vmatpush2.msra.mxu0 0.0
        %981 = vmatprep.subr.mxu0 0.0
        %982 = vmatpush2.msra.mxu0 0.0
        %983 = vmatprep.subr.mxu0 0.0
        %984 = vmatpush2.msra.mxu0 0.0
        %985 = vmatprep.subr.mxu0 0.0
        %986 = vmatpush2.msra.mxu0 0.0
        %987 = vmatprep.subr.mxu0 0.0
        %988 = vmatpush2.msra.mxu0 0.0
        %989 = vmatprep.subr.mxu0 0.0
        %990 = vmatpush2.msra.mxu0 0.0
        %991 = vmatprep.subr.mxu0 0.0
        %992 = vmatpush2.msra.mxu0 0.0
        %993 = vmatprep.subr.mxu0 0.0
        %994 = vmatpush2.msra.mxu0 0.0
        %995 = vmatprep.subr.mxu0 0.0
        %996 = vmatpush2.msra.mxu0 0.0
        %997 = vmatprep.mubr.f32.mxu0 0.0
        %998 = vmatmul.mubr.f32.gmra.mxu0 %v928
        %v999 = vpop.f32.mrf.mxu0
        %v1000 = vadd.f32 0.0, %v999
        %v1001 = vpop.f32.mrf.mxu0
        %1002 = vmatprep.mubr.f32.mxu0 0.0
        %1003 = vmatmul.mubr.f32.gmra.mxu0 %v931
        %v1004 = vpop.f32.mrf.mxu0
        %v1005 = vadd.f32 0.0, %v1004
        %v1006 = vpop.f32.mrf.mxu0
        %1007 = vdwg.mxu0
        %v1008 = vadd.f32 %v924, %v1000
        %v1009 = vadd.f32 %v925, %v1005
        %vm1010 = vcmask 261120
        %1011 = vst.msk [vmem:[#allocation5] sm:$0xff] %vm1010, %v1008
        %1012 = vst.msk [vmem:[#allocation5 + $0x8] sm:$0xff] %vm1010, %v1009
        %p1013 = scmp.eq.s32.totalorder %s31, 3
        // Predicated region
        $region65: #{tpu_custom_call.1} parent=47 // pred_check
          %p1014 = pneg %p1013
        $region66: #{tpu_custom_call.1} parent=47 // pred_check_branch
          %1016 = sbr.rel (%p1014) target = $region68
        $region67: #{tpu_custom_call.1} parent=47 // pred_region
          %v1017 = vld [vmem:[#allocation5] sm:$0xff]
          %v1018 = vld [vmem:[#allocation5 + $0x8] sm:$0xff]
          %v1019 = vsel %vm1010, %v1017, 0.0
          %1020 = vadd.xlane.f32.xlu0 %v1019
          %v1021 = vpop.xlane.xlu0 %1020
          %v1022 = vsel %vm1010, %v1018, 0.0
          %1023 = vadd.xlane.f32.xlu0 %v1022
          %v1024 = vpop.xlane.xlu0 %1023
          %v1025 = vrcp.pop 32.0
          %v1026 = vmul.f32 %v1021, %v1025
          %v1027 = vmul.f32 %v1024, %v1025
          %v1028 = vsub.f32 %v1017, %v1026
          %v1029 = vsub.f32 %v1018, %v1027
          %v1030 = vmul.f32 %v1028, %v1028
          %v1031 = vmul.f32 %v1029, %v1029
          %v1032 = vsel %vm1010, %v1030, 0.0
          %1033 = vadd.xlane.f32.xlu0 %v1032
          %v1034 = vpop.xlane.xlu0 %1033
          %v1035 = vsel %vm1010, %v1031, 0.0
          %1036 = vadd.xlane.f32.xlu0 %v1035
          %v1037 = vpop.xlane.xlu0 %1036
          %v1038 = vmul.f32 %v1034, %v1025
          %v1039 = vmul.f32 %v1037, %v1025
          %v1040 = vadd.f32 %v1038, 1e-05
          %v1041 = vadd.f32 %v1039, 1e-05
          %v1042 = vrsqrt.pop %v1040
          %v1043 = vrsqrt.pop %v1041
          %v1044 = vmul.f32 %v1028, %v1042
          %v1045 = vmul.f32 %v1029, %v1043
          %v1046 = vld [vmem:[%s5] sm:$0x1]
          %v1048 = vlaneseq
          %v1049 = vshrl.u32 %v1048, 7
          %v1050 = vsub.s32 0, %v1049
          %v1051 = vrot.slane %v1046, %v1050
          %v1053 = vmul.f32 %v1044, %v1051
          %v1054 = vmul.f32 %v1045, %v1051
          %v1055 = vld [vmem:[%s6] sm:$0x1]
          %v1057 = vlaneseq
          %v1058 = vshrl.u32 %v1057, 7
          %v1059 = vsub.s32 0, %v1058
          %v1060 = vrot.slane %v1055, %v1059
          %v1062 = vadd.f32 %v1053, %v1060
          %v1063 = vadd.f32 %v1054, %v1060
          %1064 = vst.msk [vmem:[#allocation12] sm:$0xff] %vm1010, %v1062
          %1065 = vst.msk [vmem:[#allocation12 + $0x8] sm:$0xff] %vm1010, %v1063
        $region68: #{tpu_custom_call.1} parent=47 // pred_fallthru
          _
        %s1066 = sand.u32 %s231, 1
        %s1067 = scalar_lea.sflag [#allocation14], %s1066
        %s1068 = sand.u32 %s231, 1
        %s1069 = smul.addr %s1068, 16
        %s1070 = scalar_lea.vmem [#allocation13], %s1069
        // Predicated region
        $region69: #{tpu_custom_call.1} parent=47 // pred_check
          %p1071 = pneg %p213
        $region70: #{tpu_custom_call.1} parent=47 // pred_check_branch
          %1073 = sbr.rel (%p1071) target = $region72
        $region71: #{tpu_custom_call.1} parent=47 // pred_region
          %s1074 = smul.u32 2, %s30
          %s1076 = ssub.s32 256, 256
          %1077 = vsyncadd [#allocation8], %s1076
          %s1078 = smul.addr %s1074, 128
          %s1079 = scalar_lea.hbm %s7, %s1078
          %s1080 = sshll.u32 [#allocation12], 4
          %s1081 = int_to_ptr.vmem [resolvable:$true] %s1080
          %1086 = dma.vmem_to_hbm [thread:$0]  %s1081, 256, %s1079, [#allocation8], 128, 128, 8
        $region72: #{tpu_custom_call.1} parent=47 // pred_fallthru
          _
        // Predicated region
        $region73: #{tpu_custom_call.1} parent=47 // pred_check
          %p1087 = pneg %p241
        $region74: #{tpu_custom_call.1} parent=47 // pred_check_branch
          %1089 = sbr.rel (%p1087) target = $region76
        $region75: #{tpu_custom_call.1} parent=47 // pred_region
          %s1090 = smul.u32 2, %s30
          %s1092 = ssub.s32 256, 256
          %1093 = vsyncadd %s1067, %s1092
          %s1094 = smul.addr %s31, 2
          %s1095 = sadd.s32 %s1090, %s1094
          %s1096 = smul.addr %s1095, 128
          %s1097 = scalar_lea.hbm %s8, %s1096
          %s1098 = sshll.u32 %s1070, 4
          %s1099 = int_to_ptr.vmem [resolvable:$true] %s1098
          %1104 = dma.vmem_to_hbm [thread:$0]  %s1099, 256, %s1097, %s1067, 128, 128, 8
        $region76: #{tpu_custom_call.1} parent=47 // pred_fallthru
          _
        // Predicated region
        $region77: #{tpu_custom_call.1} parent=47 // pred_check
          %p1105 = pneg %p213
        $region78: #{tpu_custom_call.1} parent=47 // pred_check_branch
          %1107 = sbr.rel (%p1105) target = $region80
        $region79: #{tpu_custom_call.1} parent=47 // pred_region
          %1108 = dma.done [#allocation8], 256
        $region80: #{tpu_custom_call.1} parent=47 // pred_fallthru
          _
      $region48: #{tpu_custom_call.1} parent=5 // pred_fallthru
        _
      %p1109 = scmp.le.s32.totalorder 2, %s21
      // Predicated region
      $region81: #{tpu_custom_call.1} parent=5 // pred_check
        %p1110 = pneg %p1109
      $region82: #{tpu_custom_call.1} parent=5 // pred_check_branch
        %1112 = sbr.rel (%p1110) target = $region84
      $region83: #{tpu_custom_call.1} parent=5 // pred_region
        %s1113 = ssub.s32 %s21, 2
        // Predicated region
        $region85: #{tpu_custom_call.1} parent=83 // pred_check
          %p1114 = pneg %p247
        $region86: #{tpu_custom_call.1} parent=83 // pred_check_branch
          %1116 = sbr.rel (%p1114) target = $region88
        $region87: #{tpu_custom_call.1} parent=83 // pred_region
          %s1117 = sand.u32 %s232, 1
          %s1118 = scalar_lea.sflag [#allocation14], %s1117
          %s1119 = sand.u32 %s232, 1
          %s1120 = smul.addr %s1119, 16
          %s1121 = scalar_lea.vmem [#allocation13], %s1120
          %1122 = dma.done %s1118, 256
        $region88: #{tpu_custom_call.1} parent=83 // pred_fallthru
          _
      $region84: #{tpu_custom_call.1} parent=5 // pred_fallthru
        _
    $region6: #{tpu_custom_call.1} parent=1 // loop_footer
      %s25 = sadd.s32 1, %s21
    $region7: #{tpu_custom_call.1} parent=1 // loop_footer_branch
      %20 = sbr.rel target = $region3
    $region8: #{tpu_custom_call.1} parent=1 // loop_exit
      _
    %1123 = vsyncpa [#allocation7], 1
    %s1124 = scalar_lea.sflag [#allocation7], 1
    %1125 = vsyncpa %s1124, 1
    %1126 = vsyncpa [#allocation10], 1
    %1127 = vsyncpa [#allocation8], 1
    %s1128 = scalar_lea.sflag [#allocation8], 1
    %1129 = vsyncpa %s1128, 1
    %1130 = vsyncpa [#allocation14], 1
    %s1131 = scalar_lea.sflag [#allocation14], 1
    %1132 = vsyncpa %s1131, 1

</llo_original>
